<compile_context>
chip_gen: v7x
topology: tpu7x:2x2x1
jax: 0.10.0
libtpu: 0.0.40
codegen_flags: <defaults>
</compile_context>

<pallas_src>
import functools

import jax
import jax.numpy as jnp
from jax.experimental import pallas as pl
from jax.experimental.pallas import tpu as pltpu


def _round_up(x: int, m: int) -> int:
    return (x + m - 1) // m * m


def _encode_kernel(idx_ref, tok_hbm, out_ref, buf, sems, *,
                   tile_b, tiles_per_chunk, h_eff, inv_s):
    # idx_ref : SMEM int32[B_pad]          scalar-prefetched row ids
    # tok_hbm : HBM  [N, S, H]             full token-feature table (pl.ANY)
    # out_ref : VMEM [tile_b, h_eff] f32   lane-dense output block
    # buf     : VMEM [2, tile_b, S, H]     double-buffered gather landing zone
    # sems    : DMA semaphores [2]         one per buffer slot
    c = pl.program_id(0)                  # chunk (parallel across cores)
    t = pl.program_id(1)                  # tile within chunk (sequential)
    tile = c * tiles_per_chunk + t
    slot = t % 2

    def issue(tile_idx, slot_idx):
        base = tile_idx * tile_b
        for j in range(tile_b):            # static unroll
            row = idx_ref[base + j]        # data-dependent row id (SMEM read)
            pltpu.make_async_copy(
                tok_hbm.at[row],           # full contiguous [S, H] row
                buf.at[slot_idx, j],
                sems.at[slot_idx],
            ).start()

    # Prime the pipeline at the first tile of this chunk.
    @pl.when(t == 0)
    def _():
        issue(tile, slot)

    # Prefetch the next tile into the other slot BEFORE waiting on this one
    # (SMEM index reads happen before any .wait()).
    @pl.when(t + 1 < tiles_per_chunk)
    def _():
        issue(tile + 1, 1 - slot)

    # Drain the current slot: tile_b row-sized waits on the shared slot sem.
    for j in range(tile_b):
        pltpu.make_async_copy(
            tok_hbm.at[0], buf.at[slot, j], sems.at[slot]
        ).wait()

    # SBERT mean pooling over the token axis; f32 accumulation, no f32 staging
    # copy of the gather buffer; truncate to h_eff lanes at the load.
    x = buf.at[slot][:, :, :h_eff]                       # (tile_b, S, h_eff) table dtype
    out_ref[...] = jnp.sum(x, axis=1, dtype=jnp.float32) * inv_s


def cooking_direction_encode(indices, tok_feats, dimention, *, tile_b=128):
    """Pallas forward of CookingDirectionEncoder.

    indices:   int[B]          dataframe row ids
    tok_feats: [N, S, H]       frozen per-row transformer token outputs (bf16/f32)
    returns:   float32[B, dimention]
    """
    B = indices.shape[0]
    N, S, H = tok_feats.shape
    assert 0 < dimention <= H

    itemsize = jnp.dtype(tok_feats.dtype).itemsize

    # Pool (and store) only the lane-dense hidden prefix needed after truncation.
    h_eff = min(H, _round_up(dimention, 128)) if H % 128 == 0 else H

    # tile_b: multiple of 8, capped so the double-buffered gather scratch stays
    # within a budget that fits all generations (incl. v7x's 64 MiB VMEM).
    gather_budget = 20 << 20                                   # bytes for buf (2 slots)
    rows_fit = max(8, (gather_budget // (2 * S * H * itemsize)) // 8 * 8)
    tile_b = max(8, min(_round_up(tile_b, 8), int(rows_fit), _round_up(B, 8)))

    n_tiles = pl.cdiv(B, tile_b)
    # Outer "parallel" chunk axis only when each chunk still has >=2 tiles, so
    # v7x gets both TensorCores without losing intra-chunk DMA/compute overlap.
    num_chunks = 2 if n_tiles >= 4 else 1
    tiles_per_chunk = pl.cdiv(n_tiles, num_chunks)
    B_pad = num_chunks * tiles_per_chunk * tile_b

    # Guard against out-of-range row ids (would be an OOB DMA) and pad the
    # index list to a whole number of tiles (padded rows gather row 0).
    idx = jnp.clip(indices.astype(jnp.int32), 0, N - 1)
    if B_pad != B:
        idx = jnp.concatenate([idx, jnp.zeros((B_pad - B,), jnp.int32)])

    # Scoped VMEM: double-buffered gather + double-buffered output block +
    # worst-case f32 pooling temporary + headroom; clamp to stay under v7x's
    # 64 MiB physical VMEM and never below the largest per-chip default.
    buf_bytes = 2 * tile_b * S * H * itemsize
    out_bytes = 2 * tile_b * h_eff * 4
    tmp_bytes = tile_b * S * h_eff * 4
    vmem_limit = int(min(max(buf_bytes + out_bytes + tmp_bytes + (4 << 20),
                             32 << 20), 60 << 20))

    out = pl.pallas_call(
        functools.partial(_encode_kernel, tile_b=tile_b,
                          tiles_per_chunk=tiles_per_chunk,
                          h_eff=h_eff, inv_s=1.0 / S),
        out_shape=jax.ShapeDtypeStruct((B_pad, h_eff), jnp.float32),
        grid_spec=pltpu.PrefetchScalarGridSpec(
            num_scalar_prefetch=1,
            grid=(num_chunks, tiles_per_chunk),
            in_specs=[pl.BlockSpec(memory_space=pl.ANY)],     # tok_feats stays in HBM
            out_specs=pl.BlockSpec(
                (tile_b, h_eff),
                lambda c, t, idx_ref: (c * tiles_per_chunk + t, 0)),
            scratch_shapes=[
                pltpu.VMEM((2, tile_b, S, H), tok_feats.dtype),
                pltpu.SemaphoreType.DMA((2,)),
            ],
        ),
        compiler_params=pltpu.CompilerParams(
            dimension_semantics=("parallel", "arbitrary"),
            vmem_limit_bytes=vmem_limit,
        ),
    )(idx, tok_feats)

    return out[:B, :dimention]


def _reference(indices, tok_feats, dimention):
    gathered = tok_feats[jnp.clip(indices, 0, tok_feats.shape[0] - 1)]   # [B, S, H]
    pooled = jnp.mean(gathered.astype(jnp.float32), axis=1)
    return pooled[:, :dimention]


if __name__ == "__main__":
    key = jax.random.PRNGKey(0)
    k_feat, k_idx = jax.random.split(key)

    num_rows = 24     # rows in the synthetic "dataframe"
    seq = 8           # tokens per direction text
    hidden = 256      # transformer hidden size (MiniLM analogue, shrunk)
    dimention = 64    # truncate_dim
    batch = 12        # len(indices)  (not a multiple of 8 -> exercises padding)

    # TODO(synk): real SBERT token outputs come from the pretrained
    # 'paraphrase-MiniLM-L6-v2' transformer over data.loc[indices, 'direction'];
    # replaced here by a deterministic synthetic table (bf16 in HBM, f32 pooling).
    tok_feats = jax.random.normal(
        k_feat, (num_rows, seq, hidden), dtype=jnp.float32
    ).astype(jnp.bfloat16)
    indices = jax.random.randint(k_idx, (batch,), 0, num_rows, dtype=jnp.int32)

    out = jax.block_until_ready(cooking_direction_encode(indices, tok_feats, dimention))

    ref = _reference(indices, tok_feats, dimention)
    assert out.shape == (batch, dimention) and out.dtype == jnp.float32
    assert jnp.allclose(out, ref, atol=1e-5, rtol=1e-5)

    print("KERNEL_OK")
</pallas_src>

<mosaic_0001>
module attributes {stable_mosaic.version = 11 : i64} {
  func.func @_encode_kernel(%arg0: i32, %arg1: i32, %arg2: memref<16xi32, #tpu.memory_space<smem>>, %arg3: memref<24x8x256xbf16, #tpu.memory_space<any>>, %arg4: memref<16x128xf32, #tpu.memory_space<vmem>>, %arg5: memref<2x16x8x256xbf16, #tpu.memory_space<vmem>>, %arg6: memref<2x!tpu.dma_semaphore, #tpu.memory_space<semaphore_mem>>) attributes {dimension_semantics = [#tpu.dimension_semantics<parallel>, #tpu.dimension_semantics<arbitrary>], iteration_bounds = array<i64: 1, 1>, scalar_prefetch = 1 : i64, scratch_operands = 2 : i64, tpu.core_type = #tpu.core_type<tc>, window_params = [{}, {transform_indices = @transform_1, window_bounds = array<i64: 16, 128>}]} {
    %c1_i32 = arith.constant 1 : i32
    %0 = arith.muli %arg0, %c1_i32 : i32
    %1 = arith.addi %0, %arg1 : i32
    %c2_i32 = arith.constant 2 : i32
    %c0_i32 = arith.constant 0 : i32
    %2 = arith.cmpi eq, %c2_i32, %c0_i32 : i32
    %c1_i32_0 = arith.constant 1 : i32
    %3 = arith.select %2, %c1_i32_0, %c2_i32 : i32
    %4 = arith.remsi %arg1, %3 : i32
    %c0_i32_1 = arith.constant 0 : i32
    %5 = arith.cmpi ne, %4, %c0_i32_1 : i32
    %c0_i32_2 = arith.constant 0 : i32
    %6 = arith.cmpi slt, %4, %c0_i32_2 : i32
    %c0_i32_3 = arith.constant 0 : i32
    %7 = arith.cmpi slt, %3, %c0_i32_3 : i32
    %8 = arith.xori %6, %7 : i1
    %9 = arith.andi %8, %5 : i1
    %10 = arith.addi %4, %3 : i32
    %11 = arith.select %9, %10, %4 : i32
    %c0_i32_4 = arith.constant 0 : i32
    %12 = arith.cmpi eq, %arg1, %c0_i32_4 : i32
    %13 = arith.extui %12 : i1 to i32
    %c0_i32_5 = arith.constant 0 : i32
    %14 = arith.cmpi ne, %13, %c0_i32_5 : i32
    scf.if %14 {
      %c16_i32 = arith.constant 16 : i32
      %123 = arith.muli %1, %c16_i32 : i32
      %c0_i32_100 = arith.constant 0 : i32
      %124 = arith.addi %123, %c0_i32_100 : i32
      %125 = arith.index_cast %124 : i32 to index
      %126 = memref.load %arg2[%125] : memref<16xi32, #tpu.memory_space<smem>>
      %c0_i32_101 = arith.constant 0 : i32
      %c0_i32_102 = arith.constant 0 : i32
      %c0_i32_103 = arith.constant 0 : i32
      %127 = tpu.memref_slice %arg3[%126, %c0_i32_102, %c0_i32_103] : memref<24x8x256xbf16, #tpu.memory_space<any>> -> memref<1x8x256xbf16, #tpu.memory_space<any>>
      %128 = tpu.memref_squeeze %127 : memref<1x8x256xbf16, #tpu.memory_space<any>> -> memref<8x256xbf16, #tpu.memory_space<any>>
      %c0_i32_104 = arith.constant 0 : i32
      %c0_i32_105 = arith.constant 0 : i32
      %129 = tpu.memref_slice %arg5[%11, %c0_i32_101, %c0_i32_104, %c0_i32_105] : memref<2x16x8x256xbf16, #tpu.memory_space<vmem>> -> memref<1x1x8x256xbf16, #tpu.memory_space<vmem>>
      %130 = tpu.memref_squeeze %129 : memref<1x1x8x256xbf16, #tpu.memory_space<vmem>> -> memref<8x256xbf16, #tpu.memory_space<vmem>>
      %131 = tpu.memref_slice %arg6[%11] : memref<2x!tpu.dma_semaphore, #tpu.memory_space<semaphore_mem>> -> memref<1x!tpu.dma_semaphore, #tpu.memory_space<semaphore_mem>>
      %132 = tpu.memref_squeeze %131 : memref<1x!tpu.dma_semaphore, #tpu.memory_space<semaphore_mem>> -> memref<!tpu.dma_semaphore, #tpu.memory_space<semaphore_mem>>
      tpu.enqueue_dma source(%128 : memref<8x256xbf16, #tpu.memory_space<any>>) target(%130 : memref<8x256xbf16, #tpu.memory_space<vmem>>) target_semaphore(%132 : memref<!tpu.dma_semaphore, #tpu.memory_space<semaphore_mem>>)
      %c1_i32_106 = arith.constant 1 : i32
      %133 = arith.addi %123, %c1_i32_106 : i32
      %134 = arith.index_cast %133 : i32 to index
      %135 = memref.load %arg2[%134] : memref<16xi32, #tpu.memory_space<smem>>
      %c1_i32_107 = arith.constant 1 : i32
      %c0_i32_108 = arith.constant 0 : i32
      %c0_i32_109 = arith.constant 0 : i32
      %136 = tpu.memref_slice %arg3[%135, %c0_i32_108, %c0_i32_109] : memref<24x8x256xbf16, #tpu.memory_space<any>> -> memref<1x8x256xbf16, #tpu.memory_space<any>>
      %137 = tpu.memref_squeeze %136 : memref<1x8x256xbf16, #tpu.memory_space<any>> -> memref<8x256xbf16, #tpu.memory_space<any>>
      %c0_i32_110 = arith.constant 0 : i32
      %c0_i32_111 = arith.constant 0 : i32
      %138 = tpu.memref_slice %arg5[%11, %c1_i32_107, %c0_i32_110, %c0_i32_111] : memref<2x16x8x256xbf16, #tpu.memory_space<vmem>> -> memref<1x1x8x256xbf16, #tpu.memory_space<vmem>>
      %139 = tpu.memref_squeeze %138 : memref<1x1x8x256xbf16, #tpu.memory_space<vmem>> -> memref<8x256xbf16, #tpu.memory_space<vmem>>
      %140 = tpu.memref_slice %arg6[%11] : memref<2x!tpu.dma_semaphore, #tpu.memory_space<semaphore_mem>> -> memref<1x!tpu.dma_semaphore, #tpu.memory_space<semaphore_mem>>
      %141 = tpu.memref_squeeze %140 : memref<1x!tpu.dma_semaphore, #tpu.memory_space<semaphore_mem>> -> memref<!tpu.dma_semaphore, #tpu.memory_space<semaphore_mem>>
      tpu.enqueue_dma source(%137 : memref<8x256xbf16, #tpu.memory_space<any>>) target(%139 : memref<8x256xbf16, #tpu.memory_space<vmem>>) target_semaphore(%141 : memref<!tpu.dma_semaphore, #tpu.memory_space<semaphore_mem>>)
      %c2_i32_112 = arith.constant 2 : i32
      %142 = arith.addi %123, %c2_i32_112 : i32
      %143 = arith.index_cast %142 : i32 to index
      %144 = memref.load %arg2[%143] : memref<16xi32, #tpu.memory_space<smem>>
      %c2_i32_113 = arith.constant 2 : i32
      %c0_i32_114 = arith.constant 0 : i32
      %c0_i32_115 = arith.constant 0 : i32
      %145 = tpu.memref_slice %arg3[%144, %c0_i32_114, %c0_i32_115] : memref<24x8x256xbf16, #tpu.memory_space<any>> -> memref<1x8x256xbf16, #tpu.memory_space<any>>
      %146 = tpu.memref_squeeze %145 : memref<1x8x256xbf16, #tpu.memory_space<any>> -> memref<8x256xbf16, #tpu.memory_space<any>>
      %c0_i32_116 = arith.constant 0 : i32
      %c0_i32_117 = arith.constant 0 : i32
      %147 = tpu.memref_slice %arg5[%11, %c2_i32_113, %c0_i32_116, %c0_i32_117] : memref<2x16x8x256xbf16, #tpu.memory_space<vmem>> -> memref<1x1x8x256xbf16, #tpu.memory_space<vmem>>
      %148 = tpu.memref_squeeze %147 : memref<1x1x8x256xbf16, #tpu.memory_space<vmem>> -> memref<8x256xbf16, #tpu.memory_space<vmem>>
      %149 = tpu.memref_slice %arg6[%11] : memref<2x!tpu.dma_semaphore, #tpu.memory_space<semaphore_mem>> -> memref<1x!tpu.dma_semaphore, #tpu.memory_space<semaphore_mem>>
      %150 = tpu.memref_squeeze %149 : memref<1x!tpu.dma_semaphore, #tpu.memory_space<semaphore_mem>> -> memref<!tpu.dma_semaphore, #tpu.memory_space<semaphore_mem>>
      tpu.enqueue_dma source(%146 : memref<8x256xbf16, #tpu.memory_space<any>>) target(%148 : memref<8x256xbf16, #tpu.memory_space<vmem>>) target_semaphore(%150 : memref<!tpu.dma_semaphore, #tpu.memory_space<semaphore_mem>>)
      %c3_i32_118 = arith.constant 3 : i32
      %151 = arith.addi %123, %c3_i32_118 : i32
      %152 = arith.index_cast %151 : i32 to index
      %153 = memref.load %arg2[%152] : memref<16xi32, #tpu.memory_space<smem>>
      %c3_i32_119 = arith.constant 3 : i32
      %c0_i32_120 = arith.constant 0 : i32
      %c0_i32_121 = arith.constant 0 : i32
      %154 = tpu.memref_slice %arg3[%153, %c0_i32_120, %c0_i32_121] : memref<24x8x256xbf16, #tpu.memory_space<any>> -> memref<1x8x256xbf16, #tpu.memory_space<any>>
      %155 = tpu.memref_squeeze %154 : memref<1x8x256xbf16, #tpu.memory_space<any>> -> memref<8x256xbf16, #tpu.memory_space<any>>
      %c0_i32_122 = arith.constant 0 : i32
      %c0_i32_123 = arith.constant 0 : i32
      %156 = tpu.memref_slice %arg5[%11, %c3_i32_119, %c0_i32_122, %c0_i32_123] : memref<2x16x8x256xbf16, #tpu.memory_space<vmem>> -> memref<1x1x8x256xbf16, #tpu.memory_space<vmem>>
      %157 = tpu.memref_squeeze %156 : memref<1x1x8x256xbf16, #tpu.memory_space<vmem>> -> memref<8x256xbf16, #tpu.memory_space<vmem>>
      %158 = tpu.memref_slice %arg6[%11] : memref<2x!tpu.dma_semaphore, #tpu.memory_space<semaphore_mem>> -> memref<1x!tpu.dma_semaphore, #tpu.memory_space<semaphore_mem>>
      %159 = tpu.memref_squeeze %158 : memref<1x!tpu.dma_semaphore, #tpu.memory_space<semaphore_mem>> -> memref<!tpu.dma_semaphore, #tpu.memory_space<semaphore_mem>>
      tpu.enqueue_dma source(%155 : memref<8x256xbf16, #tpu.memory_space<any>>) target(%157 : memref<8x256xbf16, #tpu.memory_space<vmem>>) target_semaphore(%159 : memref<!tpu.dma_semaphore, #tpu.memory_space<semaphore_mem>>)
      %c4_i32_124 = arith.constant 4 : i32
      %160 = arith.addi %123, %c4_i32_124 : i32
      %161 = arith.index_cast %160 : i32 to index
      %162 = memref.load %arg2[%161] : memref<16xi32, #tpu.memory_space<smem>>
      %c4_i32_125 = arith.constant 4 : i32
      %c0_i32_126 = arith.constant 0 : i32
      %c0_i32_127 = arith.constant 0 : i32
      %163 = tpu.memref_slice %arg3[%162, %c0_i32_126, %c0_i32_127] : memref<24x8x256xbf16, #tpu.memory_space<any>> -> memref<1x8x256xbf16, #tpu.memory_space<any>>
      %164 = tpu.memref_squeeze %163 : memref<1x8x256xbf16, #tpu.memory_space<any>> -> memref<8x256xbf16, #tpu.memory_space<any>>
      %c0_i32_128 = arith.constant 0 : i32
      %c0_i32_129 = arith.constant 0 : i32
      %165 = tpu.memref_slice %arg5[%11, %c4_i32_125, %c0_i32_128, %c0_i32_129] : memref<2x16x8x256xbf16, #tpu.memory_space<vmem>> -> memref<1x1x8x256xbf16, #tpu.memory_space<vmem>>
      %166 = tpu.memref_squeeze %165 : memref<1x1x8x256xbf16, #tpu.memory_space<vmem>> -> memref<8x256xbf16, #tpu.memory_space<vmem>>
      %167 = tpu.memref_slice %arg6[%11] : memref<2x!tpu.dma_semaphore, #tpu.memory_space<semaphore_mem>> -> memref<1x!tpu.dma_semaphore, #tpu.memory_space<semaphore_mem>>
      %168 = tpu.memref_squeeze %167 : memref<1x!tpu.dma_semaphore, #tpu.memory_space<semaphore_mem>> -> memref<!tpu.dma_semaphore, #tpu.memory_space<semaphore_mem>>
      tpu.enqueue_dma source(%164 : memref<8x256xbf16, #tpu.memory_space<any>>) target(%166 : memref<8x256xbf16, #tpu.memory_space<vmem>>) target_semaphore(%168 : memref<!tpu.dma_semaphore, #tpu.memory_space<semaphore_mem>>)
      %c5_i32_130 = arith.constant 5 : i32
      %169 = arith.addi %123, %c5_i32_130 : i32
      %170 = arith.index_cast %169 : i32 to index
      %171 = memref.load %arg2[%170] : memref<16xi32, #tpu.memory_space<smem>>
      %c5_i32_131 = arith.constant 5 : i32
      %c0_i32_132 = arith.constant 0 : i32
      %c0_i32_133 = arith.constant 0 : i32
      %172 = tpu.memref_slice %arg3[%171, %c0_i32_132, %c0_i32_133] : memref<24x8x256xbf16, #tpu.memory_space<any>> -> memref<1x8x256xbf16, #tpu.memory_space<any>>
      %173 = tpu.memref_squeeze %172 : memref<1x8x256xbf16, #tpu.memory_space<any>> -> memref<8x256xbf16, #tpu.memory_space<any>>
      %c0_i32_134 = arith.constant 0 : i32
      %c0_i32_135 = arith.constant 0 : i32
      %174 = tpu.memref_slice %arg5[%11, %c5_i32_131, %c0_i32_134, %c0_i32_135] : memref<2x16x8x256xbf16, #tpu.memory_space<vmem>> -> memref<1x1x8x256xbf16, #tpu.memory_space<vmem>>
      %175 = tpu.memref_squeeze %174 : memref<1x1x8x256xbf16, #tpu.memory_space<vmem>> -> memref<8x256xbf16, #tpu.memory_space<vmem>>
      %176 = tpu.memref_slice %arg6[%11] : memref<2x!tpu.dma_semaphore, #tpu.memory_space<semaphore_mem>> -> memref<1x!tpu.dma_semaphore, #tpu.memory_space<semaphore_mem>>
      %177 = tpu.memref_squeeze %176 : memref<1x!tpu.dma_semaphore, #tpu.memory_space<semaphore_mem>> -> memref<!tpu.dma_semaphore, #tpu.memory_space<semaphore_mem>>
      tpu.enqueue_dma source(%173 : memref<8x256xbf16, #tpu.memory_space<any>>) target(%175 : memref<8x256xbf16, #tpu.memory_space<vmem>>) target_semaphore(%177 : memref<!tpu.dma_semaphore, #tpu.memory_space<semaphore_mem>>)
      %c6_i32_136 = arith.constant 6 : i32
      %178 = arith.addi %123, %c6_i32_136 : i32
      %179 = arith.index_cast %178 : i32 to index
      %180 = memref.load %arg2[%179] : memref<16xi32, #tpu.memory_space<smem>>
      %c6_i32_137 = arith.constant 6 : i32
      %c0_i32_138 = arith.constant 0 : i32
      %c0_i32_139 = arith.constant 0 : i32
      %181 = tpu.memref_slice %arg3[%180, %c0_i32_138, %c0_i32_139] : memref<24x8x256xbf16, #tpu.memory_space<any>> -> memref<1x8x256xbf16, #tpu.memory_space<any>>
      %182 = tpu.memref_squeeze %181 : memref<1x8x256xbf16, #tpu.memory_space<any>> -> memref<8x256xbf16, #tpu.memory_space<any>>
      %c0_i32_140 = arith.constant 0 : i32
      %c0_i32_141 = arith.constant 0 : i32
      %183 = tpu.memref_slice %arg5[%11, %c6_i32_137, %c0_i32_140, %c0_i32_141] : memref<2x16x8x256xbf16, #tpu.memory_space<vmem>> -> memref<1x1x8x256xbf16, #tpu.memory_space<vmem>>
      %184 = tpu.memref_squeeze %183 : memref<1x1x8x256xbf16, #tpu.memory_space<vmem>> -> memref<8x256xbf16, #tpu.memory_space<vmem>>
      %185 = tpu.memref_slice %arg6[%11] : memref<2x!tpu.dma_semaphore, #tpu.memory_space<semaphore_mem>> -> memref<1x!tpu.dma_semaphore, #tpu.memory_space<semaphore_mem>>
      %186 = tpu.memref_squeeze %185 : memref<1x!tpu.dma_semaphore, #tpu.memory_space<semaphore_mem>> -> memref<!tpu.dma_semaphore, #tpu.memory_space<semaphore_mem>>
      tpu.enqueue_dma source(%182 : memref<8x256xbf16, #tpu.memory_space<any>>) target(%184 : memref<8x256xbf16, #tpu.memory_space<vmem>>) target_semaphore(%186 : memref<!tpu.dma_semaphore, #tpu.memory_space<semaphore_mem>>)
      %c7_i32_142 = arith.constant 7 : i32
      %187 = arith.addi %123, %c7_i32_142 : i32
      %188 = arith.index_cast %187 : i32 to index
      %189 = memref.load %arg2[%188] : memref<16xi32, #tpu.memory_space<smem>>
      %c7_i32_143 = arith.constant 7 : i32
      %c0_i32_144 = arith.constant 0 : i32
      %c0_i32_145 = arith.constant 0 : i32
      %190 = tpu.memref_slice %arg3[%189, %c0_i32_144, %c0_i32_145] : memref<24x8x256xbf16, #tpu.memory_space<any>> -> memref<1x8x256xbf16, #tpu.memory_space<any>>
      %191 = tpu.memref_squeeze %190 : memref<1x8x256xbf16, #tpu.memory_space<any>> -> memref<8x256xbf16, #tpu.memory_space<any>>
      %c0_i32_146 = arith.constant 0 : i32
      %c0_i32_147 = arith.constant 0 : i32
      %192 = tpu.memref_slice %arg5[%11, %c7_i32_143, %c0_i32_146, %c0_i32_147] : memref<2x16x8x256xbf16, #tpu.memory_space<vmem>> -> memref<1x1x8x256xbf16, #tpu.memory_space<vmem>>
      %193 = tpu.memref_squeeze %192 : memref<1x1x8x256xbf16, #tpu.memory_space<vmem>> -> memref<8x256xbf16, #tpu.memory_space<vmem>>
      %194 = tpu.memref_slice %arg6[%11] : memref<2x!tpu.dma_semaphore, #tpu.memory_space<semaphore_mem>> -> memref<1x!tpu.dma_semaphore, #tpu.memory_space<semaphore_mem>>
      %195 = tpu.memref_squeeze %194 : memref<1x!tpu.dma_semaphore, #tpu.memory_space<semaphore_mem>> -> memref<!tpu.dma_semaphore, #tpu.memory_space<semaphore_mem>>
      tpu.enqueue_dma source(%191 : memref<8x256xbf16, #tpu.memory_space<any>>) target(%193 : memref<8x256xbf16, #tpu.memory_space<vmem>>) target_semaphore(%195 : memref<!tpu.dma_semaphore, #tpu.memory_space<semaphore_mem>>)
      %c8_i32_148 = arith.constant 8 : i32
      %196 = arith.addi %123, %c8_i32_148 : i32
      %197 = arith.index_cast %196 : i32 to index
      %198 = memref.load %arg2[%197] : memref<16xi32, #tpu.memory_space<smem>>
      %c8_i32_149 = arith.constant 8 : i32
      %c0_i32_150 = arith.constant 0 : i32
      %c0_i32_151 = arith.constant 0 : i32
      %199 = tpu.memref_slice %arg3[%198, %c0_i32_150, %c0_i32_151] : memref<24x8x256xbf16, #tpu.memory_space<any>> -> memref<1x8x256xbf16, #tpu.memory_space<any>>
      %200 = tpu.memref_squeeze %199 : memref<1x8x256xbf16, #tpu.memory_space<any>> -> memref<8x256xbf16, #tpu.memory_space<any>>
      %c0_i32_152 = arith.constant 0 : i32
      %c0_i32_153 = arith.constant 0 : i32
      %201 = tpu.memref_slice %arg5[%11, %c8_i32_149, %c0_i32_152, %c0_i32_153] : memref<2x16x8x256xbf16, #tpu.memory_space<vmem>> -> memref<1x1x8x256xbf16, #tpu.memory_space<vmem>>
      %202 = tpu.memref_squeeze %201 : memref<1x1x8x256xbf16, #tpu.memory_space<vmem>> -> memref<8x256xbf16, #tpu.memory_space<vmem>>
      %203 = tpu.memref_slice %arg6[%11] : memref<2x!tpu.dma_semaphore, #tpu.memory_space<semaphore_mem>> -> memref<1x!tpu.dma_semaphore, #tpu.memory_space<semaphore_mem>>
      %204 = tpu.memref_squeeze %203 : memref<1x!tpu.dma_semaphore, #tpu.memory_space<semaphore_mem>> -> memref<!tpu.dma_semaphore, #tpu.memory_space<semaphore_mem>>
      tpu.enqueue_dma source(%200 : memref<8x256xbf16, #tpu.memory_space<any>>) target(%202 : memref<8x256xbf16, #tpu.memory_space<vmem>>) target_semaphore(%204 : memref<!tpu.dma_semaphore, #tpu.memory_space<semaphore_mem>>)
      %c9_i32_154 = arith.constant 9 : i32
      %205 = arith.addi %123, %c9_i32_154 : i32
      %206 = arith.index_cast %205 : i32 to index
      %207 = memref.load %arg2[%206] : memref<16xi32, #tpu.memory_space<smem>>
      %c9_i32_155 = arith.constant 9 : i32
      %c0_i32_156 = arith.constant 0 : i32
      %c0_i32_157 = arith.constant 0 : i32
      %208 = tpu.memref_slice %arg3[%207, %c0_i32_156, %c0_i32_157] : memref<24x8x256xbf16, #tpu.memory_space<any>> -> memref<1x8x256xbf16, #tpu.memory_space<any>>
      %209 = tpu.memref_squeeze %208 : memref<1x8x256xbf16, #tpu.memory_space<any>> -> memref<8x256xbf16, #tpu.memory_space<any>>
      %c0_i32_158 = arith.constant 0 : i32
      %c0_i32_159 = arith.constant 0 : i32
      %210 = tpu.memref_slice %arg5[%11, %c9_i32_155, %c0_i32_158, %c0_i32_159] : memref<2x16x8x256xbf16, #tpu.memory_space<vmem>> -> memref<1x1x8x256xbf16, #tpu.memory_space<vmem>>
      %211 = tpu.memref_squeeze %210 : memref<1x1x8x256xbf16, #tpu.memory_space<vmem>> -> memref<8x256xbf16, #tpu.memory_space<vmem>>
      %212 = tpu.memref_slice %arg6[%11] : memref<2x!tpu.dma_semaphore, #tpu.memory_space<semaphore_mem>> -> memref<1x!tpu.dma_semaphore, #tpu.memory_space<semaphore_mem>>
      %213 = tpu.memref_squeeze %212 : memref<1x!tpu.dma_semaphore, #tpu.memory_space<semaphore_mem>> -> memref<!tpu.dma_semaphore, #tpu.memory_space<semaphore_mem>>
      tpu.enqueue_dma source(%209 : memref<8x256xbf16, #tpu.memory_space<any>>) target(%211 : memref<8x256xbf16, #tpu.memory_space<vmem>>) target_semaphore(%213 : memref<!tpu.dma_semaphore, #tpu.memory_space<semaphore_mem>>)
      %c10_i32_160 = arith.constant 10 : i32
      %214 = arith.addi %123, %c10_i32_160 : i32
      %215 = arith.index_cast %214 : i32 to index
      %216 = memref.load %arg2[%215] : memref<16xi32, #tpu.memory_space<smem>>
      %c10_i32_161 = arith.constant 10 : i32
      %c0_i32_162 = arith.constant 0 : i32
      %c0_i32_163 = arith.constant 0 : i32
      %217 = tpu.memref_slice %arg3[%216, %c0_i32_162, %c0_i32_163] : memref<24x8x256xbf16, #tpu.memory_space<any>> -> memref<1x8x256xbf16, #tpu.memory_space<any>>
      %218 = tpu.memref_squeeze %217 : memref<1x8x256xbf16, #tpu.memory_space<any>> -> memref<8x256xbf16, #tpu.memory_space<any>>
      %c0_i32_164 = arith.constant 0 : i32
      %c0_i32_165 = arith.constant 0 : i32
      %219 = tpu.memref_slice %arg5[%11, %c10_i32_161, %c0_i32_164, %c0_i32_165] : memref<2x16x8x256xbf16, #tpu.memory_space<vmem>> -> memref<1x1x8x256xbf16, #tpu.memory_space<vmem>>
      %220 = tpu.memref_squeeze %219 : memref<1x1x8x256xbf16, #tpu.memory_space<vmem>> -> memref<8x256xbf16, #tpu.memory_space<vmem>>
      %221 = tpu.memref_slice %arg6[%11] : memref<2x!tpu.dma_semaphore, #tpu.memory_space<semaphore_mem>> -> memref<1x!tpu.dma_semaphore, #tpu.memory_space<semaphore_mem>>
      %222 = tpu.memref_squeeze %221 : memref<1x!tpu.dma_semaphore, #tpu.memory_space<semaphore_mem>> -> memref<!tpu.dma_semaphore, #tpu.memory_space<semaphore_mem>>
      tpu.enqueue_dma source(%218 : memref<8x256xbf16, #tpu.memory_space<any>>) target(%220 : memref<8x256xbf16, #tpu.memory_space<vmem>>) target_semaphore(%222 : memref<!tpu.dma_semaphore, #tpu.memory_space<semaphore_mem>>)
      %c11_i32_166 = arith.constant 11 : i32
      %223 = arith.addi %123, %c11_i32_166 : i32
      %224 = arith.index_cast %223 : i32 to index
      %225 = memref.load %arg2[%224] : memref<16xi32, #tpu.memory_space<smem>>
      %c11_i32_167 = arith.constant 11 : i32
      %c0_i32_168 = arith.constant 0 : i32
      %c0_i32_169 = arith.constant 0 : i32
      %226 = tpu.memref_slice %arg3[%225, %c0_i32_168, %c0_i32_169] : memref<24x8x256xbf16, #tpu.memory_space<any>> -> memref<1x8x256xbf16, #tpu.memory_space<any>>
      %227 = tpu.memref_squeeze %226 : memref<1x8x256xbf16, #tpu.memory_space<any>> -> memref<8x256xbf16, #tpu.memory_space<any>>
      %c0_i32_170 = arith.constant 0 : i32
      %c0_i32_171 = arith.constant 0 : i32
      %228 = tpu.memref_slice %arg5[%11, %c11_i32_167, %c0_i32_170, %c0_i32_171] : memref<2x16x8x256xbf16, #tpu.memory_space<vmem>> -> memref<1x1x8x256xbf16, #tpu.memory_space<vmem>>
      %229 = tpu.memref_squeeze %228 : memref<1x1x8x256xbf16, #tpu.memory_space<vmem>> -> memref<8x256xbf16, #tpu.memory_space<vmem>>
      %230 = tpu.memref_slice %arg6[%11] : memref<2x!tpu.dma_semaphore, #tpu.memory_space<semaphore_mem>> -> memref<1x!tpu.dma_semaphore, #tpu.memory_space<semaphore_mem>>
      %231 = tpu.memref_squeeze %230 : memref<1x!tpu.dma_semaphore, #tpu.memory_space<semaphore_mem>> -> memref<!tpu.dma_semaphore, #tpu.memory_space<semaphore_mem>>
      tpu.enqueue_dma source(%227 : memref<8x256xbf16, #tpu.memory_space<any>>) target(%229 : memref<8x256xbf16, #tpu.memory_space<vmem>>) target_semaphore(%231 : memref<!tpu.dma_semaphore, #tpu.memory_space<semaphore_mem>>)
      %c12_i32_172 = arith.constant 12 : i32
      %232 = arith.addi %123, %c12_i32_172 : i32
      %233 = arith.index_cast %232 : i32 to index
      %234 = memref.load %arg2[%233] : memref<16xi32, #tpu.memory_space<smem>>
      %c12_i32_173 = arith.constant 12 : i32
      %c0_i32_174 = arith.constant 0 : i32
      %c0_i32_175 = arith.constant 0 : i32
      %235 = tpu.memref_slice %arg3[%234, %c0_i32_174, %c0_i32_175] : memref<24x8x256xbf16, #tpu.memory_space<any>> -> memref<1x8x256xbf16, #tpu.memory_space<any>>
      %236 = tpu.memref_squeeze %235 : memref<1x8x256xbf16, #tpu.memory_space<any>> -> memref<8x256xbf16, #tpu.memory_space<any>>
      %c0_i32_176 = arith.constant 0 : i32
      %c0_i32_177 = arith.constant 0 : i32
      %237 = tpu.memref_slice %arg5[%11, %c12_i32_173, %c0_i32_176, %c0_i32_177] : memref<2x16x8x256xbf16, #tpu.memory_space<vmem>> -> memref<1x1x8x256xbf16, #tpu.memory_space<vmem>>
      %238 = tpu.memref_squeeze %237 : memref<1x1x8x256xbf16, #tpu.memory_space<vmem>> -> memref<8x256xbf16, #tpu.memory_space<vmem>>
      %239 = tpu.memref_slice %arg6[%11] : memref<2x!tpu.dma_semaphore, #tpu.memory_space<semaphore_mem>> -> memref<1x!tpu.dma_semaphore, #tpu.memory_space<semaphore_mem>>
      %240 = tpu.memref_squeeze %239 : memref<1x!tpu.dma_semaphore, #tpu.memory_space<semaphore_mem>> -> memref<!tpu.dma_semaphore, #tpu.memory_space<semaphore_mem>>
      tpu.enqueue_dma source(%236 : memref<8x256xbf16, #tpu.memory_space<any>>) target(%238 : memref<8x256xbf16, #tpu.memory_space<vmem>>) target_semaphore(%240 : memref<!tpu.dma_semaphore, #tpu.memory_space<semaphore_mem>>)
      %c13_i32_178 = arith.constant 13 : i32
      %241 = arith.addi %123, %c13_i32_178 : i32
      %242 = arith.index_cast %241 : i32 to index
      %243 = memref.load %arg2[%242] : memref<16xi32, #tpu.memory_space<smem>>
      %c13_i32_179 = arith.constant 13 : i32
      %c0_i32_180 = arith.constant 0 : i32
      %c0_i32_181 = arith.constant 0 : i32
      %244 = tpu.memref_slice %arg3[%243, %c0_i32_180, %c0_i32_181] : memref<24x8x256xbf16, #tpu.memory_space<any>> -> memref<1x8x256xbf16, #tpu.memory_space<any>>
      %245 = tpu.memref_squeeze %244 : memref<1x8x256xbf16, #tpu.memory_space<any>> -> memref<8x256xbf16, #tpu.memory_space<any>>
      %c0_i32_182 = arith.constant 0 : i32
      %c0_i32_183 = arith.constant 0 : i32
      %246 = tpu.memref_slice %arg5[%11, %c13_i32_179, %c0_i32_182, %c0_i32_183] : memref<2x16x8x256xbf16, #tpu.memory_space<vmem>> -> memref<1x1x8x256xbf16, #tpu.memory_space<vmem>>
      %247 = tpu.memref_squeeze %246 : memref<1x1x8x256xbf16, #tpu.memory_space<vmem>> -> memref<8x256xbf16, #tpu.memory_space<vmem>>
      %248 = tpu.memref_slice %arg6[%11] : memref<2x!tpu.dma_semaphore, #tpu.memory_space<semaphore_mem>> -> memref<1x!tpu.dma_semaphore, #tpu.memory_space<semaphore_mem>>
      %249 = tpu.memref_squeeze %248 : memref<1x!tpu.dma_semaphore, #tpu.memory_space<semaphore_mem>> -> memref<!tpu.dma_semaphore, #tpu.memory_space<semaphore_mem>>
      tpu.enqueue_dma source(%245 : memref<8x256xbf16, #tpu.memory_space<any>>) target(%247 : memref<8x256xbf16, #tpu.memory_space<vmem>>) target_semaphore(%249 : memref<!tpu.dma_semaphore, #tpu.memory_space<semaphore_mem>>)
      %c14_i32_184 = arith.constant 14 : i32
      %250 = arith.addi %123, %c14_i32_184 : i32
      %251 = arith.index_cast %250 : i32 to index
      %252 = memref.load %arg2[%251] : memref<16xi32, #tpu.memory_space<smem>>
      %c14_i32_185 = arith.constant 14 : i32
      %c0_i32_186 = arith.constant 0 : i32
      %c0_i32_187 = arith.constant 0 : i32
      %253 = tpu.memref_slice %arg3[%252, %c0_i32_186, %c0_i32_187] : memref<24x8x256xbf16, #tpu.memory_space<any>> -> memref<1x8x256xbf16, #tpu.memory_space<any>>
      %254 = tpu.memref_squeeze %253 : memref<1x8x256xbf16, #tpu.memory_space<any>> -> memref<8x256xbf16, #tpu.memory_space<any>>
      %c0_i32_188 = arith.constant 0 : i32
      %c0_i32_189 = arith.constant 0 : i32
      %255 = tpu.memref_slice %arg5[%11, %c14_i32_185, %c0_i32_188, %c0_i32_189] : memref<2x16x8x256xbf16, #tpu.memory_space<vmem>> -> memref<1x1x8x256xbf16, #tpu.memory_space<vmem>>
      %256 = tpu.memref_squeeze %255 : memref<1x1x8x256xbf16, #tpu.memory_space<vmem>> -> memref<8x256xbf16, #tpu.memory_space<vmem>>
      %257 = tpu.memref_slice %arg6[%11] : memref<2x!tpu.dma_semaphore, #tpu.memory_space<semaphore_mem>> -> memref<1x!tpu.dma_semaphore, #tpu.memory_space<semaphore_mem>>
      %258 = tpu.memref_squeeze %257 : memref<1x!tpu.dma_semaphore, #tpu.memory_space<semaphore_mem>> -> memref<!tpu.dma_semaphore, #tpu.memory_space<semaphore_mem>>
      tpu.enqueue_dma source(%254 : memref<8x256xbf16, #tpu.memory_space<any>>) target(%256 : memref<8x256xbf16, #tpu.memory_space<vmem>>) target_semaphore(%258 : memref<!tpu.dma_semaphore, #tpu.memory_space<semaphore_mem>>)
      %c15_i32_190 = arith.constant 15 : i32
      %259 = arith.addi %123, %c15_i32_190 : i32
      %260 = arith.index_cast %259 : i32 to index
      %261 = memref.load %arg2[%260] : memref<16xi32, #tpu.memory_space<smem>>
      %c15_i32_191 = arith.constant 15 : i32
      %c0_i32_192 = arith.constant 0 : i32
      %c0_i32_193 = arith.constant 0 : i32
      %262 = tpu.memref_slice %arg3[%261, %c0_i32_192, %c0_i32_193] : memref<24x8x256xbf16, #tpu.memory_space<any>> -> memref<1x8x256xbf16, #tpu.memory_space<any>>
      %263 = tpu.memref_squeeze %262 : memref<1x8x256xbf16, #tpu.memory_space<any>> -> memref<8x256xbf16, #tpu.memory_space<any>>
      %c0_i32_194 = arith.constant 0 : i32
      %c0_i32_195 = arith.constant 0 : i32
      %264 = tpu.memref_slice %arg5[%11, %c15_i32_191, %c0_i32_194, %c0_i32_195] : memref<2x16x8x256xbf16, #tpu.memory_space<vmem>> -> memref<1x1x8x256xbf16, #tpu.memory_space<vmem>>
      %265 = tpu.memref_squeeze %264 : memref<1x1x8x256xbf16, #tpu.memory_space<vmem>> -> memref<8x256xbf16, #tpu.memory_space<vmem>>
      %266 = tpu.memref_slice %arg6[%11] : memref<2x!tpu.dma_semaphore, #tpu.memory_space<semaphore_mem>> -> memref<1x!tpu.dma_semaphore, #tpu.memory_space<semaphore_mem>>
      %267 = tpu.memref_squeeze %266 : memref<1x!tpu.dma_semaphore, #tpu.memory_space<semaphore_mem>> -> memref<!tpu.dma_semaphore, #tpu.memory_space<semaphore_mem>>
      tpu.enqueue_dma source(%263 : memref<8x256xbf16, #tpu.memory_space<any>>) target(%265 : memref<8x256xbf16, #tpu.memory_space<vmem>>) target_semaphore(%267 : memref<!tpu.dma_semaphore, #tpu.memory_space<semaphore_mem>>)
    } else {
    }
    %c1_i32_6 = arith.constant 1 : i32
    %15 = arith.addi %arg1, %c1_i32_6 : i32
    %c1_i32_7 = arith.constant 1 : i32
    %16 = arith.cmpi slt, %15, %c1_i32_7 : i32
    %17 = arith.extui %16 : i1 to i32
    %c0_i32_8 = arith.constant 0 : i32
    %18 = arith.cmpi ne, %17, %c0_i32_8 : i32
    scf.if %18 {
      %c1_i32_100 = arith.constant 1 : i32
      %123 = arith.addi %1, %c1_i32_100 : i32
      %c1_i32_101 = arith.constant 1 : i32
      %124 = arith.subi %c1_i32_101, %11 : i32
      %c16_i32 = arith.constant 16 : i32
      %125 = arith.muli %123, %c16_i32 : i32
      %c0_i32_102 = arith.constant 0 : i32
      %126 = arith.addi %125, %c0_i32_102 : i32
      %127 = arith.index_cast %126 : i32 to index
      %128 = memref.load %arg2[%127] : memref<16xi32, #tpu.memory_space<smem>>
      %c0_i32_103 = arith.constant 0 : i32
      %c0_i32_104 = arith.constant 0 : i32
      %c0_i32_105 = arith.constant 0 : i32
      %129 = tpu.memref_slice %arg3[%128, %c0_i32_104, %c0_i32_105] : memref<24x8x256xbf16, #tpu.memory_space<any>> -> memref<1x8x256xbf16, #tpu.memory_space<any>>
      %130 = tpu.memref_squeeze %129 : memref<1x8x256xbf16, #tpu.memory_space<any>> -> memref<8x256xbf16, #tpu.memory_space<any>>
      %c0_i32_106 = arith.constant 0 : i32
      %c0_i32_107 = arith.constant 0 : i32
      %131 = tpu.memref_slice %arg5[%124, %c0_i32_103, %c0_i32_106, %c0_i32_107] : memref<2x16x8x256xbf16, #tpu.memory_space<vmem>> -> memref<1x1x8x256xbf16, #tpu.memory_space<vmem>>
      %132 = tpu.memref_squeeze %131 : memref<1x1x8x256xbf16, #tpu.memory_space<vmem>> -> memref<8x256xbf16, #tpu.memory_space<vmem>>
      %133 = tpu.memref_slice %arg6[%124] : memref<2x!tpu.dma_semaphore, #tpu.memory_space<semaphore_mem>> -> memref<1x!tpu.dma_semaphore, #tpu.memory_space<semaphore_mem>>
      %134 = tpu.memref_squeeze %133 : memref<1x!tpu.dma_semaphore, #tpu.memory_space<semaphore_mem>> -> memref<!tpu.dma_semaphore, #tpu.memory_space<semaphore_mem>>
      tpu.enqueue_dma source(%130 : memref<8x256xbf16, #tpu.memory_space<any>>) target(%132 : memref<8x256xbf16, #tpu.memory_space<vmem>>) target_semaphore(%134 : memref<!tpu.dma_semaphore, #tpu.memory_space<semaphore_mem>>)
      %c1_i32_108 = arith.constant 1 : i32
      %135 = arith.addi %125, %c1_i32_108 : i32
      %136 = arith.index_cast %135 : i32 to index
      %137 = memref.load %arg2[%136] : memref<16xi32, #tpu.memory_space<smem>>
      %c1_i32_109 = arith.constant 1 : i32
      %c0_i32_110 = arith.constant 0 : i32
      %c0_i32_111 = arith.constant 0 : i32
      %138 = tpu.memref_slice %arg3[%137, %c0_i32_110, %c0_i32_111] : memref<24x8x256xbf16, #tpu.memory_space<any>> -> memref<1x8x256xbf16, #tpu.memory_space<any>>
      %139 = tpu.memref_squeeze %138 : memref<1x8x256xbf16, #tpu.memory_space<any>> -> memref<8x256xbf16, #tpu.memory_space<any>>
      %c0_i32_112 = arith.constant 0 : i32
      %c0_i32_113 = arith.constant 0 : i32
      %140 = tpu.memref_slice %arg5[%124, %c1_i32_109, %c0_i32_112, %c0_i32_113] : memref<2x16x8x256xbf16, #tpu.memory_space<vmem>> -> memref<1x1x8x256xbf16, #tpu.memory_space<vmem>>
      %141 = tpu.memref_squeeze %140 : memref<1x1x8x256xbf16, #tpu.memory_space<vmem>> -> memref<8x256xbf16, #tpu.memory_space<vmem>>
      %142 = tpu.memref_slice %arg6[%124] : memref<2x!tpu.dma_semaphore, #tpu.memory_space<semaphore_mem>> -> memref<1x!tpu.dma_semaphore, #tpu.memory_space<semaphore_mem>>
      %143 = tpu.memref_squeeze %142 : memref<1x!tpu.dma_semaphore, #tpu.memory_space<semaphore_mem>> -> memref<!tpu.dma_semaphore, #tpu.memory_space<semaphore_mem>>
      tpu.enqueue_dma source(%139 : memref<8x256xbf16, #tpu.memory_space<any>>) target(%141 : memref<8x256xbf16, #tpu.memory_space<vmem>>) target_semaphore(%143 : memref<!tpu.dma_semaphore, #tpu.memory_space<semaphore_mem>>)
      %c2_i32_114 = arith.constant 2 : i32
      %144 = arith.addi %125, %c2_i32_114 : i32
      %145 = arith.index_cast %144 : i32 to index
      %146 = memref.load %arg2[%145] : memref<16xi32, #tpu.memory_space<smem>>
      %c2_i32_115 = arith.constant 2 : i32
      %c0_i32_116 = arith.constant 0 : i32
      %c0_i32_117 = arith.constant 0 : i32
      %147 = tpu.memref_slice %arg3[%146, %c0_i32_116, %c0_i32_117] : memref<24x8x256xbf16, #tpu.memory_space<any>> -> memref<1x8x256xbf16, #tpu.memory_space<any>>
      %148 = tpu.memref_squeeze %147 : memref<1x8x256xbf16, #tpu.memory_space<any>> -> memref<8x256xbf16, #tpu.memory_space<any>>
      %c0_i32_118 = arith.constant 0 : i32
      %c0_i32_119 = arith.constant 0 : i32
      %149 = tpu.memref_slice %arg5[%124, %c2_i32_115, %c0_i32_118, %c0_i32_119] : memref<2x16x8x256xbf16, #tpu.memory_space<vmem>> -> memref<1x1x8x256xbf16, #tpu.memory_space<vmem>>
      %150 = tpu.memref_squeeze %149 : memref<1x1x8x256xbf16, #tpu.memory_space<vmem>> -> memref<8x256xbf16, #tpu.memory_space<vmem>>
      %151 = tpu.memref_slice %arg6[%124] : memref<2x!tpu.dma_semaphore, #tpu.memory_space<semaphore_mem>> -> memref<1x!tpu.dma_semaphore, #tpu.memory_space<semaphore_mem>>
      %152 = tpu.memref_squeeze %151 : memref<1x!tpu.dma_semaphore, #tpu.memory_space<semaphore_mem>> -> memref<!tpu.dma_semaphore, #tpu.memory_space<semaphore_mem>>
      tpu.enqueue_dma source(%148 : memref<8x256xbf16, #tpu.memory_space<any>>) target(%150 : memref<8x256xbf16, #tpu.memory_space<vmem>>) target_semaphore(%152 : memref<!tpu.dma_semaphore, #tpu.memory_space<semaphore_mem>>)
      %c3_i32_120 = arith.constant 3 : i32
      %153 = arith.addi %125, %c3_i32_120 : i32
      %154 = arith.index_cast %153 : i32 to index
      %155 = memref.load %arg2[%154] : memref<16xi32, #tpu.memory_space<smem>>
      %c3_i32_121 = arith.constant 3 : i32
      %c0_i32_122 = arith.constant 0 : i32
      %c0_i32_123 = arith.constant 0 : i32
      %156 = tpu.memref_slice %arg3[%155, %c0_i32_122, %c0_i32_123] : memref<24x8x256xbf16, #tpu.memory_space<any>> -> memref<1x8x256xbf16, #tpu.memory_space<any>>
      %157 = tpu.memref_squeeze %156 : memref<1x8x256xbf16, #tpu.memory_space<any>> -> memref<8x256xbf16, #tpu.memory_space<any>>
      %c0_i32_124 = arith.constant 0 : i32
      %c0_i32_125 = arith.constant 0 : i32
      %158 = tpu.memref_slice %arg5[%124, %c3_i32_121, %c0_i32_124, %c0_i32_125] : memref<2x16x8x256xbf16, #tpu.memory_space<vmem>> -> memref<1x1x8x256xbf16, #tpu.memory_space<vmem>>
      %159 = tpu.memref_squeeze %158 : memref<1x1x8x256xbf16, #tpu.memory_space<vmem>> -> memref<8x256xbf16, #tpu.memory_space<vmem>>
      %160 = tpu.memref_slice %arg6[%124] : memref<2x!tpu.dma_semaphore, #tpu.memory_space<semaphore_mem>> -> memref<1x!tpu.dma_semaphore, #tpu.memory_space<semaphore_mem>>
      %161 = tpu.memref_squeeze %160 : memref<1x!tpu.dma_semaphore, #tpu.memory_space<semaphore_mem>> -> memref<!tpu.dma_semaphore, #tpu.memory_space<semaphore_mem>>
      tpu.enqueue_dma source(%157 : memref<8x256xbf16, #tpu.memory_space<any>>) target(%159 : memref<8x256xbf16, #tpu.memory_space<vmem>>) target_semaphore(%161 : memref<!tpu.dma_semaphore, #tpu.memory_space<semaphore_mem>>)
      %c4_i32_126 = arith.constant 4 : i32
      %162 = arith.addi %125, %c4_i32_126 : i32
      %163 = arith.index_cast %162 : i32 to index
      %164 = memref.load %arg2[%163] : memref<16xi32, #tpu.memory_space<smem>>
      %c4_i32_127 = arith.constant 4 : i32
      %c0_i32_128 = arith.constant 0 : i32
      %c0_i32_129 = arith.constant 0 : i32
      %165 = tpu.memref_slice %arg3[%164, %c0_i32_128, %c0_i32_129] : memref<24x8x256xbf16, #tpu.memory_space<any>> -> memref<1x8x256xbf16, #tpu.memory_space<any>>
      %166 = tpu.memref_squeeze %165 : memref<1x8x256xbf16, #tpu.memory_space<any>> -> memref<8x256xbf16, #tpu.memory_space<any>>
      %c0_i32_130 = arith.constant 0 : i32
      %c0_i32_131 = arith.constant 0 : i32
      %167 = tpu.memref_slice %arg5[%124, %c4_i32_127, %c0_i32_130, %c0_i32_131] : memref<2x16x8x256xbf16, #tpu.memory_space<vmem>> -> memref<1x1x8x256xbf16, #tpu.memory_space<vmem>>
      %168 = tpu.memref_squeeze %167 : memref<1x1x8x256xbf16, #tpu.memory_space<vmem>> -> memref<8x256xbf16, #tpu.memory_space<vmem>>
      %169 = tpu.memref_slice %arg6[%124] : memref<2x!tpu.dma_semaphore, #tpu.memory_space<semaphore_mem>> -> memref<1x!tpu.dma_semaphore, #tpu.memory_space<semaphore_mem>>
      %170 = tpu.memref_squeeze %169 : memref<1x!tpu.dma_semaphore, #tpu.memory_space<semaphore_mem>> -> memref<!tpu.dma_semaphore, #tpu.memory_space<semaphore_mem>>
      tpu.enqueue_dma source(%166 : memref<8x256xbf16, #tpu.memory_space<any>>) target(%168 : memref<8x256xbf16, #tpu.memory_space<vmem>>) target_semaphore(%170 : memref<!tpu.dma_semaphore, #tpu.memory_space<semaphore_mem>>)
      %c5_i32_132 = arith.constant 5 : i32
      %171 = arith.addi %125, %c5_i32_132 : i32
      %172 = arith.index_cast %171 : i32 to index
      %173 = memref.load %arg2[%172] : memref<16xi32, #tpu.memory_space<smem>>
      %c5_i32_133 = arith.constant 5 : i32
      %c0_i32_134 = arith.constant 0 : i32
      %c0_i32_135 = arith.constant 0 : i32
      %174 = tpu.memref_slice %arg3[%173, %c0_i32_134, %c0_i32_135] : memref<24x8x256xbf16, #tpu.memory_space<any>> -> memref<1x8x256xbf16, #tpu.memory_space<any>>
      %175 = tpu.memref_squeeze %174 : memref<1x8x256xbf16, #tpu.memory_space<any>> -> memref<8x256xbf16, #tpu.memory_space<any>>
      %c0_i32_136 = arith.constant 0 : i32
      %c0_i32_137 = arith.constant 0 : i32
      %176 = tpu.memref_slice %arg5[%124, %c5_i32_133, %c0_i32_136, %c0_i32_137] : memref<2x16x8x256xbf16, #tpu.memory_space<vmem>> -> memref<1x1x8x256xbf16, #tpu.memory_space<vmem>>
      %177 = tpu.memref_squeeze %176 : memref<1x1x8x256xbf16, #tpu.memory_space<vmem>> -> memref<8x256xbf16, #tpu.memory_space<vmem>>
      %178 = tpu.memref_slice %arg6[%124] : memref<2x!tpu.dma_semaphore, #tpu.memory_space<semaphore_mem>> -> memref<1x!tpu.dma_semaphore, #tpu.memory_space<semaphore_mem>>
      %179 = tpu.memref_squeeze %178 : memref<1x!tpu.dma_semaphore, #tpu.memory_space<semaphore_mem>> -> memref<!tpu.dma_semaphore, #tpu.memory_space<semaphore_mem>>
      tpu.enqueue_dma source(%175 : memref<8x256xbf16, #tpu.memory_space<any>>) target(%177 : memref<8x256xbf16, #tpu.memory_space<vmem>>) target_semaphore(%179 : memref<!tpu.dma_semaphore, #tpu.memory_space<semaphore_mem>>)
      %c6_i32_138 = arith.constant 6 : i32
      %180 = arith.addi %125, %c6_i32_138 : i32
      %181 = arith.index_cast %180 : i32 to index
      %182 = memref.load %arg2[%181] : memref<16xi32, #tpu.memory_space<smem>>
      %c6_i32_139 = arith.constant 6 : i32
      %c0_i32_140 = arith.constant 0 : i32
      %c0_i32_141 = arith.constant 0 : i32
      %183 = tpu.memref_slice %arg3[%182, %c0_i32_140, %c0_i32_141] : memref<24x8x256xbf16, #tpu.memory_space<any>> -> memref<1x8x256xbf16, #tpu.memory_space<any>>
      %184 = tpu.memref_squeeze %183 : memref<1x8x256xbf16, #tpu.memory_space<any>> -> memref<8x256xbf16, #tpu.memory_space<any>>
      %c0_i32_142 = arith.constant 0 : i32
      %c0_i32_143 = arith.constant 0 : i32
      %185 = tpu.memref_slice %arg5[%124, %c6_i32_139, %c0_i32_142, %c0_i32_143] : memref<2x16x8x256xbf16, #tpu.memory_space<vmem>> -> memref<1x1x8x256xbf16, #tpu.memory_space<vmem>>
      %186 = tpu.memref_squeeze %185 : memref<1x1x8x256xbf16, #tpu.memory_space<vmem>> -> memref<8x256xbf16, #tpu.memory_space<vmem>>
      %187 = tpu.memref_slice %arg6[%124] : memref<2x!tpu.dma_semaphore, #tpu.memory_space<semaphore_mem>> -> memref<1x!tpu.dma_semaphore, #tpu.memory_space<semaphore_mem>>
      %188 = tpu.memref_squeeze %187 : memref<1x!tpu.dma_semaphore, #tpu.memory_space<semaphore_mem>> -> memref<!tpu.dma_semaphore, #tpu.memory_space<semaphore_mem>>
      tpu.enqueue_dma source(%184 : memref<8x256xbf16, #tpu.memory_space<any>>) target(%186 : memref<8x256xbf16, #tpu.memory_space<vmem>>) target_semaphore(%188 : memref<!tpu.dma_semaphore, #tpu.memory_space<semaphore_mem>>)
      %c7_i32_144 = arith.constant 7 : i32
      %189 = arith.addi %125, %c7_i32_144 : i32
      %190 = arith.index_cast %189 : i32 to index
      %191 = memref.load %arg2[%190] : memref<16xi32, #tpu.memory_space<smem>>
      %c7_i32_145 = arith.constant 7 : i32
      %c0_i32_146 = arith.constant 0 : i32
      %c0_i32_147 = arith.constant 0 : i32
      %192 = tpu.memref_slice %arg3[%191, %c0_i32_146, %c0_i32_147] : memref<24x8x256xbf16, #tpu.memory_space<any>> -> memref<1x8x256xbf16, #tpu.memory_space<any>>
      %193 = tpu.memref_squeeze %192 : memref<1x8x256xbf16, #tpu.memory_space<any>> -> memref<8x256xbf16, #tpu.memory_space<any>>
      %c0_i32_148 = arith.constant 0 : i32
      %c0_i32_149 = arith.constant 0 : i32
      %194 = tpu.memref_slice %arg5[%124, %c7_i32_145, %c0_i32_148, %c0_i32_149] : memref<2x16x8x256xbf16, #tpu.memory_space<vmem>> -> memref<1x1x8x256xbf16, #tpu.memory_space<vmem>>
      %195 = tpu.memref_squeeze %194 : memref<1x1x8x256xbf16, #tpu.memory_space<vmem>> -> memref<8x256xbf16, #tpu.memory_space<vmem>>
      %196 = tpu.memref_slice %arg6[%124] : memref<2x!tpu.dma_semaphore, #tpu.memory_space<semaphore_mem>> -> memref<1x!tpu.dma_semaphore, #tpu.memory_space<semaphore_mem>>
      %197 = tpu.memref_squeeze %196 : memref<1x!tpu.dma_semaphore, #tpu.memory_space<semaphore_mem>> -> memref<!tpu.dma_semaphore, #tpu.memory_space<semaphore_mem>>
      tpu.enqueue_dma source(%193 : memref<8x256xbf16, #tpu.memory_space<any>>) target(%195 : memref<8x256xbf16, #tpu.memory_space<vmem>>) target_semaphore(%197 : memref<!tpu.dma_semaphore, #tpu.memory_space<semaphore_mem>>)
      %c8_i32_150 = arith.constant 8 : i32
      %198 = arith.addi %125, %c8_i32_150 : i32
      %199 = arith.index_cast %198 : i32 to index
      %200 = memref.load %arg2[%199] : memref<16xi32, #tpu.memory_space<smem>>
      %c8_i32_151 = arith.constant 8 : i32
      %c0_i32_152 = arith.constant 0 : i32
      %c0_i32_153 = arith.constant 0 : i32
      %201 = tpu.memref_slice %arg3[%200, %c0_i32_152, %c0_i32_153] : memref<24x8x256xbf16, #tpu.memory_space<any>> -> memref<1x8x256xbf16, #tpu.memory_space<any>>
      %202 = tpu.memref_squeeze %201 : memref<1x8x256xbf16, #tpu.memory_space<any>> -> memref<8x256xbf16, #tpu.memory_space<any>>
      %c0_i32_154 = arith.constant 0 : i32
      %c0_i32_155 = arith.constant 0 : i32
      %203 = tpu.memref_slice %arg5[%124, %c8_i32_151, %c0_i32_154, %c0_i32_155] : memref<2x16x8x256xbf16, #tpu.memory_space<vmem>> -> memref<1x1x8x256xbf16, #tpu.memory_space<vmem>>
      %204 = tpu.memref_squeeze %203 : memref<1x1x8x256xbf16, #tpu.memory_space<vmem>> -> memref<8x256xbf16, #tpu.memory_space<vmem>>
      %205 = tpu.memref_slice %arg6[%124] : memref<2x!tpu.dma_semaphore, #tpu.memory_space<semaphore_mem>> -> memref<1x!tpu.dma_semaphore, #tpu.memory_space<semaphore_mem>>
      %206 = tpu.memref_squeeze %205 : memref<1x!tpu.dma_semaphore, #tpu.memory_space<semaphore_mem>> -> memref<!tpu.dma_semaphore, #tpu.memory_space<semaphore_mem>>
      tpu.enqueue_dma source(%202 : memref<8x256xbf16, #tpu.memory_space<any>>) target(%204 : memref<8x256xbf16, #tpu.memory_space<vmem>>) target_semaphore(%206 : memref<!tpu.dma_semaphore, #tpu.memory_space<semaphore_mem>>)
      %c9_i32_156 = arith.constant 9 : i32
      %207 = arith.addi %125, %c9_i32_156 : i32
      %208 = arith.index_cast %207 : i32 to index
      %209 = memref.load %arg2[%208] : memref<16xi32, #tpu.memory_space<smem>>
      %c9_i32_157 = arith.constant 9 : i32
      %c0_i32_158 = arith.constant 0 : i32
      %c0_i32_159 = arith.constant 0 : i32
      %210 = tpu.memref_slice %arg3[%209, %c0_i32_158, %c0_i32_159] : memref<24x8x256xbf16, #tpu.memory_space<any>> -> memref<1x8x256xbf16, #tpu.memory_space<any>>
      %211 = tpu.memref_squeeze %210 : memref<1x8x256xbf16, #tpu.memory_space<any>> -> memref<8x256xbf16, #tpu.memory_space<any>>
      %c0_i32_160 = arith.constant 0 : i32
      %c0_i32_161 = arith.constant 0 : i32
      %212 = tpu.memref_slice %arg5[%124, %c9_i32_157, %c0_i32_160, %c0_i32_161] : memref<2x16x8x256xbf16, #tpu.memory_space<vmem>> -> memref<1x1x8x256xbf16, #tpu.memory_space<vmem>>
      %213 = tpu.memref_squeeze %212 : memref<1x1x8x256xbf16, #tpu.memory_space<vmem>> -> memref<8x256xbf16, #tpu.memory_space<vmem>>
      %214 = tpu.memref_slice %arg6[%124] : memref<2x!tpu.dma_semaphore, #tpu.memory_space<semaphore_mem>> -> memref<1x!tpu.dma_semaphore, #tpu.memory_space<semaphore_mem>>
      %215 = tpu.memref_squeeze %214 : memref<1x!tpu.dma_semaphore, #tpu.memory_space<semaphore_mem>> -> memref<!tpu.dma_semaphore, #tpu.memory_space<semaphore_mem>>
      tpu.enqueue_dma source(%211 : memref<8x256xbf16, #tpu.memory_space<any>>) target(%213 : memref<8x256xbf16, #tpu.memory_space<vmem>>) target_semaphore(%215 : memref<!tpu.dma_semaphore, #tpu.memory_space<semaphore_mem>>)
      %c10_i32_162 = arith.constant 10 : i32
      %216 = arith.addi %125, %c10_i32_162 : i32
      %217 = arith.index_cast %216 : i32 to index
      %218 = memref.load %arg2[%217] : memref<16xi32, #tpu.memory_space<smem>>
      %c10_i32_163 = arith.constant 10 : i32
      %c0_i32_164 = arith.constant 0 : i32
      %c0_i32_165 = arith.constant 0 : i32
      %219 = tpu.memref_slice %arg3[%218, %c0_i32_164, %c0_i32_165] : memref<24x8x256xbf16, #tpu.memory_space<any>> -> memref<1x8x256xbf16, #tpu.memory_space<any>>
      %220 = tpu.memref_squeeze %219 : memref<1x8x256xbf16, #tpu.memory_space<any>> -> memref<8x256xbf16, #tpu.memory_space<any>>
      %c0_i32_166 = arith.constant 0 : i32
      %c0_i32_167 = arith.constant 0 : i32
      %221 = tpu.memref_slice %arg5[%124, %c10_i32_163, %c0_i32_166, %c0_i32_167] : memref<2x16x8x256xbf16, #tpu.memory_space<vmem>> -> memref<1x1x8x256xbf16, #tpu.memory_space<vmem>>
      %222 = tpu.memref_squeeze %221 : memref<1x1x8x256xbf16, #tpu.memory_space<vmem>> -> memref<8x256xbf16, #tpu.memory_space<vmem>>
      %223 = tpu.memref_slice %arg6[%124] : memref<2x!tpu.dma_semaphore, #tpu.memory_space<semaphore_mem>> -> memref<1x!tpu.dma_semaphore, #tpu.memory_space<semaphore_mem>>
      %224 = tpu.memref_squeeze %223 : memref<1x!tpu.dma_semaphore, #tpu.memory_space<semaphore_mem>> -> memref<!tpu.dma_semaphore, #tpu.memory_space<semaphore_mem>>
      tpu.enqueue_dma source(%220 : memref<8x256xbf16, #tpu.memory_space<any>>) target(%222 : memref<8x256xbf16, #tpu.memory_space<vmem>>) target_semaphore(%224 : memref<!tpu.dma_semaphore, #tpu.memory_space<semaphore_mem>>)
      %c11_i32_168 = arith.constant 11 : i32
      %225 = arith.addi %125, %c11_i32_168 : i32
      %226 = arith.index_cast %225 : i32 to index
      %227 = memref.load %arg2[%226] : memref<16xi32, #tpu.memory_space<smem>>
      %c11_i32_169 = arith.constant 11 : i32
      %c0_i32_170 = arith.constant 0 : i32
      %c0_i32_171 = arith.constant 0 : i32
      %228 = tpu.memref_slice %arg3[%227, %c0_i32_170, %c0_i32_171] : memref<24x8x256xbf16, #tpu.memory_space<any>> -> memref<1x8x256xbf16, #tpu.memory_space<any>>
      %229 = tpu.memref_squeeze %228 : memref<1x8x256xbf16, #tpu.memory_space<any>> -> memref<8x256xbf16, #tpu.memory_space<any>>
      %c0_i32_172 = arith.constant 0 : i32
      %c0_i32_173 = arith.constant 0 : i32
      %230 = tpu.memref_slice %arg5[%124, %c11_i32_169, %c0_i32_172, %c0_i32_173] : memref<2x16x8x256xbf16, #tpu.memory_space<vmem>> -> memref<1x1x8x256xbf16, #tpu.memory_space<vmem>>
      %231 = tpu.memref_squeeze %230 : memref<1x1x8x256xbf16, #tpu.memory_space<vmem>> -> memref<8x256xbf16, #tpu.memory_space<vmem>>
      %232 = tpu.memref_slice %arg6[%124] : memref<2x!tpu.dma_semaphore, #tpu.memory_space<semaphore_mem>> -> memref<1x!tpu.dma_semaphore, #tpu.memory_space<semaphore_mem>>
      %233 = tpu.memref_squeeze %232 : memref<1x!tpu.dma_semaphore, #tpu.memory_space<semaphore_mem>> -> memref<!tpu.dma_semaphore, #tpu.memory_space<semaphore_mem>>
      tpu.enqueue_dma source(%229 : memref<8x256xbf16, #tpu.memory_space<any>>) target(%231 : memref<8x256xbf16, #tpu.memory_space<vmem>>) target_semaphore(%233 : memref<!tpu.dma_semaphore, #tpu.memory_space<semaphore_mem>>)
      %c12_i32_174 = arith.constant 12 : i32
      %234 = arith.addi %125, %c12_i32_174 : i32
      %235 = arith.index_cast %234 : i32 to index
      %236 = memref.load %arg2[%235] : memref<16xi32, #tpu.memory_space<smem>>
      %c12_i32_175 = arith.constant 12 : i32
      %c0_i32_176 = arith.constant 0 : i32
      %c0_i32_177 = arith.constant 0 : i32
      %237 = tpu.memref_slice %arg3[%236, %c0_i32_176, %c0_i32_177] : memref<24x8x256xbf16, #tpu.memory_space<any>> -> memref<1x8x256xbf16, #tpu.memory_space<any>>
      %238 = tpu.memref_squeeze %237 : memref<1x8x256xbf16, #tpu.memory_space<any>> -> memref<8x256xbf16, #tpu.memory_space<any>>
      %c0_i32_178 = arith.constant 0 : i32
      %c0_i32_179 = arith.constant 0 : i32
      %239 = tpu.memref_slice %arg5[%124, %c12_i32_175, %c0_i32_178, %c0_i32_179] : memref<2x16x8x256xbf16, #tpu.memory_space<vmem>> -> memref<1x1x8x256xbf16, #tpu.memory_space<vmem>>
      %240 = tpu.memref_squeeze %239 : memref<1x1x8x256xbf16, #tpu.memory_space<vmem>> -> memref<8x256xbf16, #tpu.memory_space<vmem>>
      %241 = tpu.memref_slice %arg6[%124] : memref<2x!tpu.dma_semaphore, #tpu.memory_space<semaphore_mem>> -> memref<1x!tpu.dma_semaphore, #tpu.memory_space<semaphore_mem>>
      %242 = tpu.memref_squeeze %241 : memref<1x!tpu.dma_semaphore, #tpu.memory_space<semaphore_mem>> -> memref<!tpu.dma_semaphore, #tpu.memory_space<semaphore_mem>>
      tpu.enqueue_dma source(%238 : memref<8x256xbf16, #tpu.memory_space<any>>) target(%240 : memref<8x256xbf16, #tpu.memory_space<vmem>>) target_semaphore(%242 : memref<!tpu.dma_semaphore, #tpu.memory_space<semaphore_mem>>)
      %c13_i32_180 = arith.constant 13 : i32
      %243 = arith.addi %125, %c13_i32_180 : i32
      %244 = arith.index_cast %243 : i32 to index
      %245 = memref.load %arg2[%244] : memref<16xi32, #tpu.memory_space<smem>>
      %c13_i32_181 = arith.constant 13 : i32
      %c0_i32_182 = arith.constant 0 : i32
      %c0_i32_183 = arith.constant 0 : i32
      %246 = tpu.memref_slice %arg3[%245, %c0_i32_182, %c0_i32_183] : memref<24x8x256xbf16, #tpu.memory_space<any>> -> memref<1x8x256xbf16, #tpu.memory_space<any>>
      %247 = tpu.memref_squeeze %246 : memref<1x8x256xbf16, #tpu.memory_space<any>> -> memref<8x256xbf16, #tpu.memory_space<any>>
      %c0_i32_184 = arith.constant 0 : i32
      %c0_i32_185 = arith.constant 0 : i32
      %248 = tpu.memref_slice %arg5[%124, %c13_i32_181, %c0_i32_184, %c0_i32_185] : memref<2x16x8x256xbf16, #tpu.memory_space<vmem>> -> memref<1x1x8x256xbf16, #tpu.memory_space<vmem>>
      %249 = tpu.memref_squeeze %248 : memref<1x1x8x256xbf16, #tpu.memory_space<vmem>> -> memref<8x256xbf16, #tpu.memory_space<vmem>>
      %250 = tpu.memref_slice %arg6[%124] : memref<2x!tpu.dma_semaphore, #tpu.memory_space<semaphore_mem>> -> memref<1x!tpu.dma_semaphore, #tpu.memory_space<semaphore_mem>>
      %251 = tpu.memref_squeeze %250 : memref<1x!tpu.dma_semaphore, #tpu.memory_space<semaphore_mem>> -> memref<!tpu.dma_semaphore, #tpu.memory_space<semaphore_mem>>
      tpu.enqueue_dma source(%247 : memref<8x256xbf16, #tpu.memory_space<any>>) target(%249 : memref<8x256xbf16, #tpu.memory_space<vmem>>) target_semaphore(%251 : memref<!tpu.dma_semaphore, #tpu.memory_space<semaphore_mem>>)
      %c14_i32_186 = arith.constant 14 : i32
      %252 = arith.addi %125, %c14_i32_186 : i32
      %253 = arith.index_cast %252 : i32 to index
      %254 = memref.load %arg2[%253] : memref<16xi32, #tpu.memory_space<smem>>
      %c14_i32_187 = arith.constant 14 : i32
      %c0_i32_188 = arith.constant 0 : i32
      %c0_i32_189 = arith.constant 0 : i32
      %255 = tpu.memref_slice %arg3[%254, %c0_i32_188, %c0_i32_189] : memref<24x8x256xbf16, #tpu.memory_space<any>> -> memref<1x8x256xbf16, #tpu.memory_space<any>>
      %256 = tpu.memref_squeeze %255 : memref<1x8x256xbf16, #tpu.memory_space<any>> -> memref<8x256xbf16, #tpu.memory_space<any>>
      %c0_i32_190 = arith.constant 0 : i32
      %c0_i32_191 = arith.constant 0 : i32
      %257 = tpu.memref_slice %arg5[%124, %c14_i32_187, %c0_i32_190, %c0_i32_191] : memref<2x16x8x256xbf16, #tpu.memory_space<vmem>> -> memref<1x1x8x256xbf16, #tpu.memory_space<vmem>>
      %258 = tpu.memref_squeeze %257 : memref<1x1x8x256xbf16, #tpu.memory_space<vmem>> -> memref<8x256xbf16, #tpu.memory_space<vmem>>
      %259 = tpu.memref_slice %arg6[%124] : memref<2x!tpu.dma_semaphore, #tpu.memory_space<semaphore_mem>> -> memref<1x!tpu.dma_semaphore, #tpu.memory_space<semaphore_mem>>
      %260 = tpu.memref_squeeze %259 : memref<1x!tpu.dma_semaphore, #tpu.memory_space<semaphore_mem>> -> memref<!tpu.dma_semaphore, #tpu.memory_space<semaphore_mem>>
      tpu.enqueue_dma source(%256 : memref<8x256xbf16, #tpu.memory_space<any>>) target(%258 : memref<8x256xbf16, #tpu.memory_space<vmem>>) target_semaphore(%260 : memref<!tpu.dma_semaphore, #tpu.memory_space<semaphore_mem>>)
      %c15_i32_192 = arith.constant 15 : i32
      %261 = arith.addi %125, %c15_i32_192 : i32
      %262 = arith.index_cast %261 : i32 to index
      %263 = memref.load %arg2[%262] : memref<16xi32, #tpu.memory_space<smem>>
      %c15_i32_193 = arith.constant 15 : i32
      %c0_i32_194 = arith.constant 0 : i32
      %c0_i32_195 = arith.constant 0 : i32
      %264 = tpu.memref_slice %arg3[%263, %c0_i32_194, %c0_i32_195] : memref<24x8x256xbf16, #tpu.memory_space<any>> -> memref<1x8x256xbf16, #tpu.memory_space<any>>
      %265 = tpu.memref_squeeze %264 : memref<1x8x256xbf16, #tpu.memory_space<any>> -> memref<8x256xbf16, #tpu.memory_space<any>>
      %c0_i32_196 = arith.constant 0 : i32
      %c0_i32_197 = arith.constant 0 : i32
      %266 = tpu.memref_slice %arg5[%124, %c15_i32_193, %c0_i32_196, %c0_i32_197] : memref<2x16x8x256xbf16, #tpu.memory_space<vmem>> -> memref<1x1x8x256xbf16, #tpu.memory_space<vmem>>
      %267 = tpu.memref_squeeze %266 : memref<1x1x8x256xbf16, #tpu.memory_space<vmem>> -> memref<8x256xbf16, #tpu.memory_space<vmem>>
      %268 = tpu.memref_slice %arg6[%124] : memref<2x!tpu.dma_semaphore, #tpu.memory_space<semaphore_mem>> -> memref<1x!tpu.dma_semaphore, #tpu.memory_space<semaphore_mem>>
      %269 = tpu.memref_squeeze %268 : memref<1x!tpu.dma_semaphore, #tpu.memory_space<semaphore_mem>> -> memref<!tpu.dma_semaphore, #tpu.memory_space<semaphore_mem>>
      tpu.enqueue_dma source(%265 : memref<8x256xbf16, #tpu.memory_space<any>>) target(%267 : memref<8x256xbf16, #tpu.memory_space<vmem>>) target_semaphore(%269 : memref<!tpu.dma_semaphore, #tpu.memory_space<semaphore_mem>>)
    } else {
    }
    %c0_i32_9 = arith.constant 0 : i32
    %c0_i32_10 = arith.constant 0 : i32
    %c0_i32_11 = arith.constant 0 : i32
    %c0_i32_12 = arith.constant 0 : i32
    %19 = tpu.memref_slice %arg3[%c0_i32_9, %c0_i32_11, %c0_i32_12] : memref<24x8x256xbf16, #tpu.memory_space<any>> -> memref<1x8x256xbf16, #tpu.memory_space<any>>
    %20 = tpu.memref_squeeze %19 : memref<1x8x256xbf16, #tpu.memory_space<any>> -> memref<8x256xbf16, #tpu.memory_space<any>>
    %c0_i32_13 = arith.constant 0 : i32
    %c0_i32_14 = arith.constant 0 : i32
    %21 = tpu.memref_slice %arg5[%11, %c0_i32_10, %c0_i32_13, %c0_i32_14] : memref<2x16x8x256xbf16, #tpu.memory_space<vmem>> -> memref<1x1x8x256xbf16, #tpu.memory_space<vmem>>
    %22 = tpu.memref_squeeze %21 : memref<1x1x8x256xbf16, #tpu.memory_space<vmem>> -> memref<8x256xbf16, #tpu.memory_space<vmem>>
    %23 = tpu.memref_slice %arg6[%11] : memref<2x!tpu.dma_semaphore, #tpu.memory_space<semaphore_mem>> -> memref<1x!tpu.dma_semaphore, #tpu.memory_space<semaphore_mem>>
    %24 = tpu.memref_squeeze %23 : memref<1x!tpu.dma_semaphore, #tpu.memory_space<semaphore_mem>> -> memref<!tpu.dma_semaphore, #tpu.memory_space<semaphore_mem>>
    tpu.wait_dma2 semaphore(%24 : memref<!tpu.dma_semaphore, #tpu.memory_space<semaphore_mem>>) src(%20 : memref<8x256xbf16, #tpu.memory_space<any>>) dst(%22 : memref<8x256xbf16, #tpu.memory_space<vmem>>)
    %c0_i32_15 = arith.constant 0 : i32
    %c1_i32_16 = arith.constant 1 : i32
    %c0_i32_17 = arith.constant 0 : i32
    %c0_i32_18 = arith.constant 0 : i32
    %25 = tpu.memref_slice %arg3[%c0_i32_15, %c0_i32_17, %c0_i32_18] : memref<24x8x256xbf16, #tpu.memory_space<any>> -> memref<1x8x256xbf16, #tpu.memory_space<any>>
    %26 = tpu.memref_squeeze %25 : memref<1x8x256xbf16, #tpu.memory_space<any>> -> memref<8x256xbf16, #tpu.memory_space<any>>
    %c0_i32_19 = arith.constant 0 : i32
    %c0_i32_20 = arith.constant 0 : i32
    %27 = tpu.memref_slice %arg5[%11, %c1_i32_16, %c0_i32_19, %c0_i32_20] : memref<2x16x8x256xbf16, #tpu.memory_space<vmem>> -> memref<1x1x8x256xbf16, #tpu.memory_space<vmem>>
    %28 = tpu.memref_squeeze %27 : memref<1x1x8x256xbf16, #tpu.memory_space<vmem>> -> memref<8x256xbf16, #tpu.memory_space<vmem>>
    %29 = tpu.memref_slice %arg6[%11] : memref<2x!tpu.dma_semaphore, #tpu.memory_space<semaphore_mem>> -> memref<1x!tpu.dma_semaphore, #tpu.memory_space<semaphore_mem>>
    %30 = tpu.memref_squeeze %29 : memref<1x!tpu.dma_semaphore, #tpu.memory_space<semaphore_mem>> -> memref<!tpu.dma_semaphore, #tpu.memory_space<semaphore_mem>>
    tpu.wait_dma2 semaphore(%30 : memref<!tpu.dma_semaphore, #tpu.memory_space<semaphore_mem>>) src(%26 : memref<8x256xbf16, #tpu.memory_space<any>>) dst(%28 : memref<8x256xbf16, #tpu.memory_space<vmem>>)
    %c0_i32_21 = arith.constant 0 : i32
    %c2_i32_22 = arith.constant 2 : i32
    %c0_i32_23 = arith.constant 0 : i32
    %c0_i32_24 = arith.constant 0 : i32
    %31 = tpu.memref_slice %arg3[%c0_i32_21, %c0_i32_23, %c0_i32_24] : memref<24x8x256xbf16, #tpu.memory_space<any>> -> memref<1x8x256xbf16, #tpu.memory_space<any>>
    %32 = tpu.memref_squeeze %31 : memref<1x8x256xbf16, #tpu.memory_space<any>> -> memref<8x256xbf16, #tpu.memory_space<any>>
    %c0_i32_25 = arith.constant 0 : i32
    %c0_i32_26 = arith.constant 0 : i32
    %33 = tpu.memref_slice %arg5[%11, %c2_i32_22, %c0_i32_25, %c0_i32_26] : memref<2x16x8x256xbf16, #tpu.memory_space<vmem>> -> memref<1x1x8x256xbf16, #tpu.memory_space<vmem>>
    %34 = tpu.memref_squeeze %33 : memref<1x1x8x256xbf16, #tpu.memory_space<vmem>> -> memref<8x256xbf16, #tpu.memory_space<vmem>>
    %35 = tpu.memref_slice %arg6[%11] : memref<2x!tpu.dma_semaphore, #tpu.memory_space<semaphore_mem>> -> memref<1x!tpu.dma_semaphore, #tpu.memory_space<semaphore_mem>>
    %36 = tpu.memref_squeeze %35 : memref<1x!tpu.dma_semaphore, #tpu.memory_space<semaphore_mem>> -> memref<!tpu.dma_semaphore, #tpu.memory_space<semaphore_mem>>
    tpu.wait_dma2 semaphore(%36 : memref<!tpu.dma_semaphore, #tpu.memory_space<semaphore_mem>>) src(%32 : memref<8x256xbf16, #tpu.memory_space<any>>) dst(%34 : memref<8x256xbf16, #tpu.memory_space<vmem>>)
    %c0_i32_27 = arith.constant 0 : i32
    %c3_i32 = arith.constant 3 : i32
    %c0_i32_28 = arith.constant 0 : i32
    %c0_i32_29 = arith.constant 0 : i32
    %37 = tpu.memref_slice %arg3[%c0_i32_27, %c0_i32_28, %c0_i32_29] : memref<24x8x256xbf16, #tpu.memory_space<any>> -> memref<1x8x256xbf16, #tpu.memory_space<any>>
    %38 = tpu.memref_squeeze %37 : memref<1x8x256xbf16, #tpu.memory_space<any>> -> memref<8x256xbf16, #tpu.memory_space<any>>
    %c0_i32_30 = arith.constant 0 : i32
    %c0_i32_31 = arith.constant 0 : i32
    %39 = tpu.memref_slice %arg5[%11, %c3_i32, %c0_i32_30, %c0_i32_31] : memref<2x16x8x256xbf16, #tpu.memory_space<vmem>> -> memref<1x1x8x256xbf16, #tpu.memory_space<vmem>>
    %40 = tpu.memref_squeeze %39 : memref<1x1x8x256xbf16, #tpu.memory_space<vmem>> -> memref<8x256xbf16, #tpu.memory_space<vmem>>
    %41 = tpu.memref_slice %arg6[%11] : memref<2x!tpu.dma_semaphore, #tpu.memory_space<semaphore_mem>> -> memref<1x!tpu.dma_semaphore, #tpu.memory_space<semaphore_mem>>
    %42 = tpu.memref_squeeze %41 : memref<1x!tpu.dma_semaphore, #tpu.memory_space<semaphore_mem>> -> memref<!tpu.dma_semaphore, #tpu.memory_space<semaphore_mem>>
    tpu.wait_dma2 semaphore(%42 : memref<!tpu.dma_semaphore, #tpu.memory_space<semaphore_mem>>) src(%38 : memref<8x256xbf16, #tpu.memory_space<any>>) dst(%40 : memref<8x256xbf16, #tpu.memory_space<vmem>>)
    %c0_i32_32 = arith.constant 0 : i32
    %c4_i32 = arith.constant 4 : i32
    %c0_i32_33 = arith.constant 0 : i32
    %c0_i32_34 = arith.constant 0 : i32
    %43 = tpu.memref_slice %arg3[%c0_i32_32, %c0_i32_33, %c0_i32_34] : memref<24x8x256xbf16, #tpu.memory_space<any>> -> memref<1x8x256xbf16, #tpu.memory_space<any>>
    %44 = tpu.memref_squeeze %43 : memref<1x8x256xbf16, #tpu.memory_space<any>> -> memref<8x256xbf16, #tpu.memory_space<any>>
    %c0_i32_35 = arith.constant 0 : i32
    %c0_i32_36 = arith.constant 0 : i32
    %45 = tpu.memref_slice %arg5[%11, %c4_i32, %c0_i32_35, %c0_i32_36] : memref<2x16x8x256xbf16, #tpu.memory_space<vmem>> -> memref<1x1x8x256xbf16, #tpu.memory_space<vmem>>
    %46 = tpu.memref_squeeze %45 : memref<1x1x8x256xbf16, #tpu.memory_space<vmem>> -> memref<8x256xbf16, #tpu.memory_space<vmem>>
    %47 = tpu.memref_slice %arg6[%11] : memref<2x!tpu.dma_semaphore, #tpu.memory_space<semaphore_mem>> -> memref<1x!tpu.dma_semaphore, #tpu.memory_space<semaphore_mem>>
    %48 = tpu.memref_squeeze %47 : memref<1x!tpu.dma_semaphore, #tpu.memory_space<semaphore_mem>> -> memref<!tpu.dma_semaphore, #tpu.memory_space<semaphore_mem>>
    tpu.wait_dma2 semaphore(%48 : memref<!tpu.dma_semaphore, #tpu.memory_space<semaphore_mem>>) src(%44 : memref<8x256xbf16, #tpu.memory_space<any>>) dst(%46 : memref<8x256xbf16, #tpu.memory_space<vmem>>)
    %c0_i32_37 = arith.constant 0 : i32
    %c5_i32 = arith.constant 5 : i32
    %c0_i32_38 = arith.constant 0 : i32
    %c0_i32_39 = arith.constant 0 : i32
    %49 = tpu.memref_slice %arg3[%c0_i32_37, %c0_i32_38, %c0_i32_39] : memref<24x8x256xbf16, #tpu.memory_space<any>> -> memref<1x8x256xbf16, #tpu.memory_space<any>>
    %50 = tpu.memref_squeeze %49 : memref<1x8x256xbf16, #tpu.memory_space<any>> -> memref<8x256xbf16, #tpu.memory_space<any>>
    %c0_i32_40 = arith.constant 0 : i32
    %c0_i32_41 = arith.constant 0 : i32
    %51 = tpu.memref_slice %arg5[%11, %c5_i32, %c0_i32_40, %c0_i32_41] : memref<2x16x8x256xbf16, #tpu.memory_space<vmem>> -> memref<1x1x8x256xbf16, #tpu.memory_space<vmem>>
    %52 = tpu.memref_squeeze %51 : memref<1x1x8x256xbf16, #tpu.memory_space<vmem>> -> memref<8x256xbf16, #tpu.memory_space<vmem>>
    %53 = tpu.memref_slice %arg6[%11] : memref<2x!tpu.dma_semaphore, #tpu.memory_space<semaphore_mem>> -> memref<1x!tpu.dma_semaphore, #tpu.memory_space<semaphore_mem>>
    %54 = tpu.memref_squeeze %53 : memref<1x!tpu.dma_semaphore, #tpu.memory_space<semaphore_mem>> -> memref<!tpu.dma_semaphore, #tpu.memory_space<semaphore_mem>>
    tpu.wait_dma2 semaphore(%54 : memref<!tpu.dma_semaphore, #tpu.memory_space<semaphore_mem>>) src(%50 : memref<8x256xbf16, #tpu.memory_space<any>>) dst(%52 : memref<8x256xbf16, #tpu.memory_space<vmem>>)
    %c0_i32_42 = arith.constant 0 : i32
    %c6_i32 = arith.constant 6 : i32
    %c0_i32_43 = arith.constant 0 : i32
    %c0_i32_44 = arith.constant 0 : i32
    %55 = tpu.memref_slice %arg3[%c0_i32_42, %c0_i32_43, %c0_i32_44] : memref<24x8x256xbf16, #tpu.memory_space<any>> -> memref<1x8x256xbf16, #tpu.memory_space<any>>
    %56 = tpu.memref_squeeze %55 : memref<1x8x256xbf16, #tpu.memory_space<any>> -> memref<8x256xbf16, #tpu.memory_space<any>>
    %c0_i32_45 = arith.constant 0 : i32
    %c0_i32_46 = arith.constant 0 : i32
    %57 = tpu.memref_slice %arg5[%11, %c6_i32, %c0_i32_45, %c0_i32_46] : memref<2x16x8x256xbf16, #tpu.memory_space<vmem>> -> memref<1x1x8x256xbf16, #tpu.memory_space<vmem>>
    %58 = tpu.memref_squeeze %57 : memref<1x1x8x256xbf16, #tpu.memory_space<vmem>> -> memref<8x256xbf16, #tpu.memory_space<vmem>>
    %59 = tpu.memref_slice %arg6[%11] : memref<2x!tpu.dma_semaphore, #tpu.memory_space<semaphore_mem>> -> memref<1x!tpu.dma_semaphore, #tpu.memory_space<semaphore_mem>>
    %60 = tpu.memref_squeeze %59 : memref<1x!tpu.dma_semaphore, #tpu.memory_space<semaphore_mem>> -> memref<!tpu.dma_semaphore, #tpu.memory_space<semaphore_mem>>
    tpu.wait_dma2 semaphore(%60 : memref<!tpu.dma_semaphore, #tpu.memory_space<semaphore_mem>>) src(%56 : memref<8x256xbf16, #tpu.memory_space<any>>) dst(%58 : memref<8x256xbf16, #tpu.memory_space<vmem>>)
    %c0_i32_47 = arith.constant 0 : i32
    %c7_i32 = arith.constant 7 : i32
    %c0_i32_48 = arith.constant 0 : i32
    %c0_i32_49 = arith.constant 0 : i32
    %61 = tpu.memref_slice %arg3[%c0_i32_47, %c0_i32_48, %c0_i32_49] : memref<24x8x256xbf16, #tpu.memory_space<any>> -> memref<1x8x256xbf16, #tpu.memory_space<any>>
    %62 = tpu.memref_squeeze %61 : memref<1x8x256xbf16, #tpu.memory_space<any>> -> memref<8x256xbf16, #tpu.memory_space<any>>
    %c0_i32_50 = arith.constant 0 : i32
    %c0_i32_51 = arith.constant 0 : i32
    %63 = tpu.memref_slice %arg5[%11, %c7_i32, %c0_i32_50, %c0_i32_51] : memref<2x16x8x256xbf16, #tpu.memory_space<vmem>> -> memref<1x1x8x256xbf16, #tpu.memory_space<vmem>>
    %64 = tpu.memref_squeeze %63 : memref<1x1x8x256xbf16, #tpu.memory_space<vmem>> -> memref<8x256xbf16, #tpu.memory_space<vmem>>
    %65 = tpu.memref_slice %arg6[%11] : memref<2x!tpu.dma_semaphore, #tpu.memory_space<semaphore_mem>> -> memref<1x!tpu.dma_semaphore, #tpu.memory_space<semaphore_mem>>
    %66 = tpu.memref_squeeze %65 : memref<1x!tpu.dma_semaphore, #tpu.memory_space<semaphore_mem>> -> memref<!tpu.dma_semaphore, #tpu.memory_space<semaphore_mem>>
    tpu.wait_dma2 semaphore(%66 : memref<!tpu.dma_semaphore, #tpu.memory_space<semaphore_mem>>) src(%62 : memref<8x256xbf16, #tpu.memory_space<any>>) dst(%64 : memref<8x256xbf16, #tpu.memory_space<vmem>>)
    %c0_i32_52 = arith.constant 0 : i32
    %c8_i32 = arith.constant 8 : i32
    %c0_i32_53 = arith.constant 0 : i32
    %c0_i32_54 = arith.constant 0 : i32
    %67 = tpu.memref_slice %arg3[%c0_i32_52, %c0_i32_53, %c0_i32_54] : memref<24x8x256xbf16, #tpu.memory_space<any>> -> memref<1x8x256xbf16, #tpu.memory_space<any>>
    %68 = tpu.memref_squeeze %67 : memref<1x8x256xbf16, #tpu.memory_space<any>> -> memref<8x256xbf16, #tpu.memory_space<any>>
    %c0_i32_55 = arith.constant 0 : i32
    %c0_i32_56 = arith.constant 0 : i32
    %69 = tpu.memref_slice %arg5[%11, %c8_i32, %c0_i32_55, %c0_i32_56] : memref<2x16x8x256xbf16, #tpu.memory_space<vmem>> -> memref<1x1x8x256xbf16, #tpu.memory_space<vmem>>
    %70 = tpu.memref_squeeze %69 : memref<1x1x8x256xbf16, #tpu.memory_space<vmem>> -> memref<8x256xbf16, #tpu.memory_space<vmem>>
    %71 = tpu.memref_slice %arg6[%11] : memref<2x!tpu.dma_semaphore, #tpu.memory_space<semaphore_mem>> -> memref<1x!tpu.dma_semaphore, #tpu.memory_space<semaphore_mem>>
    %72 = tpu.memref_squeeze %71 : memref<1x!tpu.dma_semaphore, #tpu.memory_space<semaphore_mem>> -> memref<!tpu.dma_semaphore, #tpu.memory_space<semaphore_mem>>
    tpu.wait_dma2 semaphore(%72 : memref<!tpu.dma_semaphore, #tpu.memory_space<semaphore_mem>>) src(%68 : memref<8x256xbf16, #tpu.memory_space<any>>) dst(%70 : memref<8x256xbf16, #tpu.memory_space<vmem>>)
    %c0_i32_57 = arith.constant 0 : i32
    %c9_i32 = arith.constant 9 : i32
    %c0_i32_58 = arith.constant 0 : i32
    %c0_i32_59 = arith.constant 0 : i32
    %73 = tpu.memref_slice %arg3[%c0_i32_57, %c0_i32_58, %c0_i32_59] : memref<24x8x256xbf16, #tpu.memory_space<any>> -> memref<1x8x256xbf16, #tpu.memory_space<any>>
    %74 = tpu.memref_squeeze %73 : memref<1x8x256xbf16, #tpu.memory_space<any>> -> memref<8x256xbf16, #tpu.memory_space<any>>
    %c0_i32_60 = arith.constant 0 : i32
    %c0_i32_61 = arith.constant 0 : i32
    %75 = tpu.memref_slice %arg5[%11, %c9_i32, %c0_i32_60, %c0_i32_61] : memref<2x16x8x256xbf16, #tpu.memory_space<vmem>> -> memref<1x1x8x256xbf16, #tpu.memory_space<vmem>>
    %76 = tpu.memref_squeeze %75 : memref<1x1x8x256xbf16, #tpu.memory_space<vmem>> -> memref<8x256xbf16, #tpu.memory_space<vmem>>
    %77 = tpu.memref_slice %arg6[%11] : memref<2x!tpu.dma_semaphore, #tpu.memory_space<semaphore_mem>> -> memref<1x!tpu.dma_semaphore, #tpu.memory_space<semaphore_mem>>
    %78 = tpu.memref_squeeze %77 : memref<1x!tpu.dma_semaphore, #tpu.memory_space<semaphore_mem>> -> memref<!tpu.dma_semaphore, #tpu.memory_space<semaphore_mem>>
    tpu.wait_dma2 semaphore(%78 : memref<!tpu.dma_semaphore, #tpu.memory_space<semaphore_mem>>) src(%74 : memref<8x256xbf16, #tpu.memory_space<any>>) dst(%76 : memref<8x256xbf16, #tpu.memory_space<vmem>>)
    %c0_i32_62 = arith.constant 0 : i32
    %c10_i32 = arith.constant 10 : i32
    %c0_i32_63 = arith.constant 0 : i32
    %c0_i32_64 = arith.constant 0 : i32
    %79 = tpu.memref_slice %arg3[%c0_i32_62, %c0_i32_63, %c0_i32_64] : memref<24x8x256xbf16, #tpu.memory_space<any>> -> memref<1x8x256xbf16, #tpu.memory_space<any>>
    %80 = tpu.memref_squeeze %79 : memref<1x8x256xbf16, #tpu.memory_space<any>> -> memref<8x256xbf16, #tpu.memory_space<any>>
    %c0_i32_65 = arith.constant 0 : i32
    %c0_i32_66 = arith.constant 0 : i32
    %81 = tpu.memref_slice %arg5[%11, %c10_i32, %c0_i32_65, %c0_i32_66] : memref<2x16x8x256xbf16, #tpu.memory_space<vmem>> -> memref<1x1x8x256xbf16, #tpu.memory_space<vmem>>
    %82 = tpu.memref_squeeze %81 : memref<1x1x8x256xbf16, #tpu.memory_space<vmem>> -> memref<8x256xbf16, #tpu.memory_space<vmem>>
    %83 = tpu.memref_slice %arg6[%11] : memref<2x!tpu.dma_semaphore, #tpu.memory_space<semaphore_mem>> -> memref<1x!tpu.dma_semaphore, #tpu.memory_space<semaphore_mem>>
    %84 = tpu.memref_squeeze %83 : memref<1x!tpu.dma_semaphore, #tpu.memory_space<semaphore_mem>> -> memref<!tpu.dma_semaphore, #tpu.memory_space<semaphore_mem>>
    tpu.wait_dma2 semaphore(%84 : memref<!tpu.dma_semaphore, #tpu.memory_space<semaphore_mem>>) src(%80 : memref<8x256xbf16, #tpu.memory_space<any>>) dst(%82 : memref<8x256xbf16, #tpu.memory_space<vmem>>)
    %c0_i32_67 = arith.constant 0 : i32
    %c11_i32 = arith.constant 11 : i32
    %c0_i32_68 = arith.constant 0 : i32
    %c0_i32_69 = arith.constant 0 : i32
    %85 = tpu.memref_slice %arg3[%c0_i32_67, %c0_i32_68, %c0_i32_69] : memref<24x8x256xbf16, #tpu.memory_space<any>> -> memref<1x8x256xbf16, #tpu.memory_space<any>>
    %86 = tpu.memref_squeeze %85 : memref<1x8x256xbf16, #tpu.memory_space<any>> -> memref<8x256xbf16, #tpu.memory_space<any>>
    %c0_i32_70 = arith.constant 0 : i32
    %c0_i32_71 = arith.constant 0 : i32
    %87 = tpu.memref_slice %arg5[%11, %c11_i32, %c0_i32_70, %c0_i32_71] : memref<2x16x8x256xbf16, #tpu.memory_space<vmem>> -> memref<1x1x8x256xbf16, #tpu.memory_space<vmem>>
    %88 = tpu.memref_squeeze %87 : memref<1x1x8x256xbf16, #tpu.memory_space<vmem>> -> memref<8x256xbf16, #tpu.memory_space<vmem>>
    %89 = tpu.memref_slice %arg6[%11] : memref<2x!tpu.dma_semaphore, #tpu.memory_space<semaphore_mem>> -> memref<1x!tpu.dma_semaphore, #tpu.memory_space<semaphore_mem>>
    %90 = tpu.memref_squeeze %89 : memref<1x!tpu.dma_semaphore, #tpu.memory_space<semaphore_mem>> -> memref<!tpu.dma_semaphore, #tpu.memory_space<semaphore_mem>>
    tpu.wait_dma2 semaphore(%90 : memref<!tpu.dma_semaphore, #tpu.memory_space<semaphore_mem>>) src(%86 : memref<8x256xbf16, #tpu.memory_space<any>>) dst(%88 : memref<8x256xbf16, #tpu.memory_space<vmem>>)
    %c0_i32_72 = arith.constant 0 : i32
    %c12_i32 = arith.constant 12 : i32
    %c0_i32_73 = arith.constant 0 : i32
    %c0_i32_74 = arith.constant 0 : i32
    %91 = tpu.memref_slice %arg3[%c0_i32_72, %c0_i32_73, %c0_i32_74] : memref<24x8x256xbf16, #tpu.memory_space<any>> -> memref<1x8x256xbf16, #tpu.memory_space<any>>
    %92 = tpu.memref_squeeze %91 : memref<1x8x256xbf16, #tpu.memory_space<any>> -> memref<8x256xbf16, #tpu.memory_space<any>>
    %c0_i32_75 = arith.constant 0 : i32
    %c0_i32_76 = arith.constant 0 : i32
    %93 = tpu.memref_slice %arg5[%11, %c12_i32, %c0_i32_75, %c0_i32_76] : memref<2x16x8x256xbf16, #tpu.memory_space<vmem>> -> memref<1x1x8x256xbf16, #tpu.memory_space<vmem>>
    %94 = tpu.memref_squeeze %93 : memref<1x1x8x256xbf16, #tpu.memory_space<vmem>> -> memref<8x256xbf16, #tpu.memory_space<vmem>>
    %95 = tpu.memref_slice %arg6[%11] : memref<2x!tpu.dma_semaphore, #tpu.memory_space<semaphore_mem>> -> memref<1x!tpu.dma_semaphore, #tpu.memory_space<semaphore_mem>>
    %96 = tpu.memref_squeeze %95 : memref<1x!tpu.dma_semaphore, #tpu.memory_space<semaphore_mem>> -> memref<!tpu.dma_semaphore, #tpu.memory_space<semaphore_mem>>
    tpu.wait_dma2 semaphore(%96 : memref<!tpu.dma_semaphore, #tpu.memory_space<semaphore_mem>>) src(%92 : memref<8x256xbf16, #tpu.memory_space<any>>) dst(%94 : memref<8x256xbf16, #tpu.memory_space<vmem>>)
    %c0_i32_77 = arith.constant 0 : i32
    %c13_i32 = arith.constant 13 : i32
    %c0_i32_78 = arith.constant 0 : i32
    %c0_i32_79 = arith.constant 0 : i32
    %97 = tpu.memref_slice %arg3[%c0_i32_77, %c0_i32_78, %c0_i32_79] : memref<24x8x256xbf16, #tpu.memory_space<any>> -> memref<1x8x256xbf16, #tpu.memory_space<any>>
    %98 = tpu.memref_squeeze %97 : memref<1x8x256xbf16, #tpu.memory_space<any>> -> memref<8x256xbf16, #tpu.memory_space<any>>
    %c0_i32_80 = arith.constant 0 : i32
    %c0_i32_81 = arith.constant 0 : i32
    %99 = tpu.memref_slice %arg5[%11, %c13_i32, %c0_i32_80, %c0_i32_81] : memref<2x16x8x256xbf16, #tpu.memory_space<vmem>> -> memref<1x1x8x256xbf16, #tpu.memory_space<vmem>>
    %100 = tpu.memref_squeeze %99 : memref<1x1x8x256xbf16, #tpu.memory_space<vmem>> -> memref<8x256xbf16, #tpu.memory_space<vmem>>
    %101 = tpu.memref_slice %arg6[%11] : memref<2x!tpu.dma_semaphore, #tpu.memory_space<semaphore_mem>> -> memref<1x!tpu.dma_semaphore, #tpu.memory_space<semaphore_mem>>
    %102 = tpu.memref_squeeze %101 : memref<1x!tpu.dma_semaphore, #tpu.memory_space<semaphore_mem>> -> memref<!tpu.dma_semaphore, #tpu.memory_space<semaphore_mem>>
    tpu.wait_dma2 semaphore(%102 : memref<!tpu.dma_semaphore, #tpu.memory_space<semaphore_mem>>) src(%98 : memref<8x256xbf16, #tpu.memory_space<any>>) dst(%100 : memref<8x256xbf16, #tpu.memory_space<vmem>>)
    %c0_i32_82 = arith.constant 0 : i32
    %c14_i32 = arith.constant 14 : i32
    %c0_i32_83 = arith.constant 0 : i32
    %c0_i32_84 = arith.constant 0 : i32
    %103 = tpu.memref_slice %arg3[%c0_i32_82, %c0_i32_83, %c0_i32_84] : memref<24x8x256xbf16, #tpu.memory_space<any>> -> memref<1x8x256xbf16, #tpu.memory_space<any>>
    %104 = tpu.memref_squeeze %103 : memref<1x8x256xbf16, #tpu.memory_space<any>> -> memref<8x256xbf16, #tpu.memory_space<any>>
    %c0_i32_85 = arith.constant 0 : i32
    %c0_i32_86 = arith.constant 0 : i32
    %105 = tpu.memref_slice %arg5[%11, %c14_i32, %c0_i32_85, %c0_i32_86] : memref<2x16x8x256xbf16, #tpu.memory_space<vmem>> -> memref<1x1x8x256xbf16, #tpu.memory_space<vmem>>
    %106 = tpu.memref_squeeze %105 : memref<1x1x8x256xbf16, #tpu.memory_space<vmem>> -> memref<8x256xbf16, #tpu.memory_space<vmem>>
    %107 = tpu.memref_slice %arg6[%11] : memref<2x!tpu.dma_semaphore, #tpu.memory_space<semaphore_mem>> -> memref<1x!tpu.dma_semaphore, #tpu.memory_space<semaphore_mem>>
    %108 = tpu.memref_squeeze %107 : memref<1x!tpu.dma_semaphore, #tpu.memory_space<semaphore_mem>> -> memref<!tpu.dma_semaphore, #tpu.memory_space<semaphore_mem>>
    tpu.wait_dma2 semaphore(%108 : memref<!tpu.dma_semaphore, #tpu.memory_space<semaphore_mem>>) src(%104 : memref<8x256xbf16, #tpu.memory_space<any>>) dst(%106 : memref<8x256xbf16, #tpu.memory_space<vmem>>)
    %c0_i32_87 = arith.constant 0 : i32
    %c15_i32 = arith.constant 15 : i32
    %c0_i32_88 = arith.constant 0 : i32
    %c0_i32_89 = arith.constant 0 : i32
    %109 = tpu.memref_slice %arg3[%c0_i32_87, %c0_i32_88, %c0_i32_89] : memref<24x8x256xbf16, #tpu.memory_space<any>> -> memref<1x8x256xbf16, #tpu.memory_space<any>>
    %110 = tpu.memref_squeeze %109 : memref<1x8x256xbf16, #tpu.memory_space<any>> -> memref<8x256xbf16, #tpu.memory_space<any>>
    %c0_i32_90 = arith.constant 0 : i32
    %c0_i32_91 = arith.constant 0 : i32
    %111 = tpu.memref_slice %arg5[%11, %c15_i32, %c0_i32_90, %c0_i32_91] : memref<2x16x8x256xbf16, #tpu.memory_space<vmem>> -> memref<1x1x8x256xbf16, #tpu.memory_space<vmem>>
    %112 = tpu.memref_squeeze %111 : memref<1x1x8x256xbf16, #tpu.memory_space<vmem>> -> memref<8x256xbf16, #tpu.memory_space<vmem>>
    %113 = tpu.memref_slice %arg6[%11] : memref<2x!tpu.dma_semaphore, #tpu.memory_space<semaphore_mem>> -> memref<1x!tpu.dma_semaphore, #tpu.memory_space<semaphore_mem>>
    %114 = tpu.memref_squeeze %113 : memref<1x!tpu.dma_semaphore, #tpu.memory_space<semaphore_mem>> -> memref<!tpu.dma_semaphore, #tpu.memory_space<semaphore_mem>>
    tpu.wait_dma2 semaphore(%114 : memref<!tpu.dma_semaphore, #tpu.memory_space<semaphore_mem>>) src(%110 : memref<8x256xbf16, #tpu.memory_space<any>>) dst(%112 : memref<8x256xbf16, #tpu.memory_space<vmem>>)
    %c0_i32_92 = arith.constant 0 : i32
    %c0_i32_93 = arith.constant 0 : i32
    %c0_i32_94 = arith.constant 0 : i32
    %115 = tpu.memref_slice %arg5[%11, %c0_i32_92, %c0_i32_93, %c0_i32_94] : memref<2x16x8x256xbf16, #tpu.memory_space<vmem>> -> memref<1x16x8x256xbf16, #tpu.memory_space<vmem>>
    %116 = tpu.memref_squeeze %115 : memref<1x16x8x256xbf16, #tpu.memory_space<vmem>> -> memref<16x8x256xbf16, #tpu.memory_space<vmem>>
    %c0 = arith.constant 0 : index
    %c0_95 = arith.constant 0 : index
    %c0_96 = arith.constant 0 : index
    %117 = vector.load %116[%c0, %c0_95, %c0_96] : memref<16x8x256xbf16, #tpu.memory_space<vmem>>, vector<16x8x128xbf16>
    %118 = arith.extf %117 : vector<16x8x128xbf16> to vector<16x8x128xf32>
    %cst = arith.constant dense<0.000000e+00> : vector<16x128xf32>
    %119 = vector.multi_reduction <add>, %118, %cst [1] : vector<16x8x128xf32> to vector<16x128xf32>
    %cst_97 = arith.constant 1.250000e-01 : f32
    %120 = vector.broadcast %cst_97 : f32 to vector<16x128xf32>
    %121 = arith.mulf %119, %120 : vector<16x128xf32>
    %c0_98 = arith.constant 0 : index
    %c0_99 = arith.constant 0 : index
    %122 = vector.load %arg4[%c0_98, %c0_99] : memref<16x128xf32, #tpu.memory_space<vmem>>, vector<16x128xf32>
    tpu.vector_store %arg4[%c0_98, %c0_99], %121 {strides = array<i32>} : memref<16x128xf32, #tpu.memory_space<vmem>>, vector<16x128xf32>,
    return
  }
  func.func @transform_1(%arg0: i32, %arg1: i32, %arg2: memref<16xi32, #tpu.memory_space<smem>>) -> (i32, i32) {
    %c1_i32 = arith.constant 1 : i32
    %0 = arith.muli %arg0, %c1_i32 : i32
    %1 = arith.addi %0, %arg1 : i32
    %c0_i32 = arith.constant 0 : i32
    %c0_i32_0 = arith.constant 0 : i32
    return %1, %c0_i32 : i32, i32
  }
}

</mosaic_0001>

<llo_original>
// kernel: tpu_custom_call.1
$region0: #{tpu_custom_call.1}
  #allocation0 [shape = 'u32[]', space=smem, size = 0x4, offset = 0x4, fixed_abs, tag = 'smem constant byte address 0x4 - core index']
  #allocation1 [shape = 'u32[144,128]{1,0:T(1,128)}', space=vmem, size = 0x12000, scoped, tag = 'internal scratch']
  #allocation2 [shape = 'bf16[2,16,8,256]{3,2,1,0:T(8,128)(2,1)}', space=vmem, size = 0x20000, scoped, tag = 'scratch operand']
  #allocation3 [shape = 's32[2]{0}', space=sflag, size = 0x8, scoped, tag = 'scratch operand']
  #allocation4 [shape = 's32[1]{0}', space=sflag, size = 0x4, scoped, tag = 'scoped memory for tpu_custom_call.1']
  #allocation5 [shape = 'u8[512]{0}', space=smem, size = 0x200, scoped, tag = 'prefetched SMEM operand 0']
  #allocation8 [shape = 's32[]', space=sflag, size = 0x4, offset = 0, fixed_abs, tag = 'sflag constant byte address 0x0 - dummy sync flag']
  #allocation9 [shape = 's32[]', space=sflag, size = 0x4, offset = 0, fixed_abs, tag = 'sflag constant byte address 0x0 - dummy sync flag']
  #allocation10 [shape = 'u32[]', space=smem, size = 0x4, offset = 0x44, fixed_abs, tag = 'smem constant byte address 0x44 - assertion arg 0']
  #allocation11 [shape = 'u32[]', space=smem, size = 0x4, offset = 0x48, fixed_abs, tag = 'smem constant byte address 0x48 - assertion arg 1']
  #allocation12 [shape = 's32[]', space=sflag, size = 0x4, offset = 0, fixed_abs, tag = 'sflag constant byte address 0x0 - dummy sync flag']
  #allocation13 [shape = 's32[]', space=sflag, size = 0x4, offset = 0, fixed_abs, tag = 'sflag constant byte address 0x0 - dummy sync flag']
  #allocation14 [shape = 's32[]', space=sflag, size = 0x4, offset = 0, fixed_abs, tag = 'sflag constant byte address 0x0 - dummy sync flag']
  #allocation15 [shape = 's32[]', space=sflag, size = 0x4, offset = 0, fixed_abs, tag = 'sflag constant byte address 0x0 - dummy sync flag']
  #allocation16 [shape = 's32[]', space=sflag, size = 0x4, offset = 0, fixed_abs, tag = 'sflag constant byte address 0x0 - dummy sync flag']
  #allocation17 [shape = 's32[]', space=sflag, size = 0x4, offset = 0, fixed_abs, tag = 'sflag constant byte address 0x0 - dummy sync flag']
  #allocation18 [shape = 's32[]', space=sflag, size = 0x4, offset = 0, fixed_abs, tag = 'sflag constant byte address 0x0 - dummy sync flag']
  #allocation19 [shape = 's32[]', space=sflag, size = 0x4, offset = 0, fixed_abs, tag = 'sflag constant byte address 0x0 - dummy sync flag']
  #allocation20 [shape = 's32[]', space=sflag, size = 0x4, offset = 0, fixed_abs, tag = 'sflag constant byte address 0x0 - dummy sync flag']
  #allocation21 [shape = 's32[]', space=sflag, size = 0x4, offset = 0, fixed_abs, tag = 'sflag constant byte address 0x0 - dummy sync flag']
  #allocation22 [shape = 's32[]', space=sflag, size = 0x4, offset = 0, fixed_abs, tag = 'sflag constant byte address 0x0 - dummy sync flag']
  #allocation23 [shape = 's32[]', space=sflag, size = 0x4, offset = 0, fixed_abs, tag = 'sflag constant byte address 0x0 - dummy sync flag']
  #allocation24 [shape = 's32[]', space=sflag, size = 0x4, offset = 0, fixed_abs, tag = 'sflag constant byte address 0x0 - dummy sync flag']
  #allocation25 [shape = 's32[]', space=sflag, size = 0x4, offset = 0, fixed_abs, tag = 'sflag constant byte address 0x0 - dummy sync flag']
  #allocation26 [shape = 's32[]', space=sflag, size = 0x4, offset = 0, fixed_abs, tag = 'sflag constant byte address 0x0 - dummy sync flag']
  #allocation27 [shape = 's32[]', space=sflag, size = 0x4, offset = 0, fixed_abs, tag = 'sflag constant byte address 0x0 - dummy sync flag']
  #allocation28 [shape = 's32[]', space=sflag, size = 0x4, offset = 0, fixed_abs, tag = 'sflag constant byte address 0x0 - dummy sync flag']
  #allocation29 [shape = 's32[]', space=sflag, size = 0x4, offset = 0, fixed_abs, tag = 'sflag constant byte address 0x0 - dummy sync flag']
  #allocation30 [shape = 's32[]', space=sflag, size = 0x4, offset = 0, fixed_abs, tag = 'sflag constant byte address 0x0 - dummy sync flag']
  #allocation31 [shape = 's32[]', space=sflag, size = 0x4, offset = 0, fixed_abs, tag = 'sflag constant byte address 0x0 - dummy sync flag']
  #allocation32 [shape = 's32[]', space=sflag, size = 0x4, offset = 0, fixed_abs, tag = 'sflag constant byte address 0x0 - dummy sync flag']
  #allocation33 [shape = 's32[]', space=sflag, size = 0x4, offset = 0, fixed_abs, tag = 'sflag constant byte address 0x0 - dummy sync flag']
  #allocation34 [shape = 's32[]', space=sflag, size = 0x4, offset = 0, fixed_abs, tag = 'sflag constant byte address 0x0 - dummy sync flag']
  #allocation35 [shape = 's32[]', space=sflag, size = 0x4, offset = 0, fixed_abs, tag = 'sflag constant byte address 0x0 - dummy sync flag']
  #allocation36 [shape = 's32[]', space=sflag, size = 0x4, offset = 0, fixed_abs, tag = 'sflag constant byte address 0x0 - dummy sync flag']
  #allocation37 [shape = 's32[]', space=sflag, size = 0x4, offset = 0, fixed_abs, tag = 'sflag constant byte address 0x0 - dummy sync flag']
  #allocation38 [shape = 's32[]', space=sflag, size = 0x4, offset = 0, fixed_abs, tag = 'sflag constant byte address 0x0 - dummy sync flag']
  #allocation39 [shape = 's32[]', space=sflag, size = 0x4, offset = 0, fixed_abs, tag = 'sflag constant byte address 0x0 - dummy sync flag']
  #allocation40 [shape = 's32[]', space=sflag, size = 0x4, offset = 0, fixed_abs, tag = 'sflag constant byte address 0x0 - dummy sync flag']
  #allocation41 [shape = 's32[]', space=sflag, size = 0x4, offset = 0, fixed_abs, tag = 'sflag constant byte address 0x0 - dummy sync flag']
  #allocation42 [shape = 's32[]', space=sflag, size = 0x4, offset = 0, fixed_abs, tag = 'sflag constant byte address 0x0 - dummy sync flag']
  #allocation43 [shape = 's32[]', space=sflag, size = 0x4, offset = 0, fixed_abs, tag = 'sflag constant byte address 0x0 - dummy sync flag']
  #allocation44 [shape = 's32[]', space=sflag, size = 0x4, offset = 0, fixed_abs, tag = 'sflag constant byte address 0x0 - dummy sync flag']
  #allocation45 [shape = 's32[]', space=sflag, size = 0x4, offset = 0, fixed_abs, tag = 'sflag constant byte address 0x0 - dummy sync flag']
  #allocation46 [shape = 's32[]', space=sflag, size = 0x4, offset = 0, fixed_abs, tag = 'sflag constant byte address 0x0 - dummy sync flag']
  #allocation47 [shape = 's32[]', space=sflag, size = 0x4, offset = 0, fixed_abs, tag = 'sflag constant byte address 0x0 - dummy sync flag']
  #allocation48 [shape = 's32[]', space=sflag, size = 0x4, offset = 0, fixed_abs, tag = 'sflag constant byte address 0x0 - dummy sync flag']
  #allocation49 [shape = 's32[]', space=sflag, size = 0x4, offset = 0, fixed_abs, tag = 'sflag constant byte address 0x0 - dummy sync flag']
  #allocation50 [shape = 's32[]', space=sflag, size = 0x4, offset = 0, fixed_abs, tag = 'sflag constant byte address 0x0 - dummy sync flag']
  #allocation51 [shape = 's32[]', space=sflag, size = 0x4, offset = 0, fixed_abs, tag = 'sflag constant byte address 0x0 - dummy sync flag']
  #allocation52 [shape = 's32[]', space=sflag, size = 0x4, offset = 0, fixed_abs, tag = 'sflag constant byte address 0x0 - dummy sync flag']
  #allocation53 [shape = 's32[]', space=sflag, size = 0x4, offset = 0, fixed_abs, tag = 'sflag constant byte address 0x0 - dummy sync flag']
  #allocation54 [shape = 's32[]', space=sflag, size = 0x4, offset = 0, fixed_abs, tag = 'sflag constant byte address 0x0 - dummy sync flag']
  #allocation55 [shape = 's32[]', space=sflag, size = 0x4, offset = 0, fixed_abs, tag = 'sflag constant byte address 0x0 - dummy sync flag']
  #allocation56 [shape = 's32[]', space=sflag, size = 0x4, offset = 0, fixed_abs, tag = 'sflag constant byte address 0x0 - dummy sync flag']
  #allocation57 [shape = 's32[]', space=sflag, size = 0x4, offset = 0, fixed_abs, tag = 'sflag constant byte address 0x0 - dummy sync flag']
  #allocation58 [shape = 's32[]', space=sflag, size = 0x4, offset = 0, fixed_abs, tag = 'sflag constant byte address 0x0 - dummy sync flag']
  #allocation59 [shape = 's32[]', space=sflag, size = 0x4, offset = 0, fixed_abs, tag = 'sflag constant byte address 0x0 - dummy sync flag']
  #allocation60 [shape = 's32[]', space=sflag, size = 0x4, offset = 0, fixed_abs, tag = 'sflag constant byte address 0x0 - dummy sync flag']
  #allocation61 [shape = 's32[]', space=sflag, size = 0x4, offset = 0, fixed_abs, tag = 'sflag constant byte address 0x0 - dummy sync flag']
  #allocation62 [shape = 's32[]', space=sflag, size = 0x4, offset = 0, fixed_abs, tag = 'sflag constant byte address 0x0 - dummy sync flag']
  #allocation63 [shape = 's32[]', space=sflag, size = 0x4, offset = 0, fixed_abs, tag = 'sflag constant byte address 0x0 - dummy sync flag']
  #allocation64 [shape = 's32[]', space=sflag, size = 0x4, offset = 0, fixed_abs, tag = 'sflag constant byte address 0x0 - dummy sync flag']
  #allocation65 [shape = 's32[]', space=sflag, size = 0x4, offset = 0, fixed_abs, tag = 'sflag constant byte address 0x0 - dummy sync flag']
  #allocation66 [shape = 's32[]', space=sflag, size = 0x4, offset = 0, fixed_abs, tag = 'sflag constant byte address 0x0 - dummy sync flag']
  #allocation67 [shape = 's32[]', space=sflag, size = 0x4, offset = 0, fixed_abs, tag = 'sflag constant byte address 0x0 - dummy sync flag']
  #allocation68 [shape = 's32[]', space=sflag, size = 0x4, offset = 0, fixed_abs, tag = 'sflag constant byte address 0x0 - dummy sync flag']
  #allocation69 [shape = 's32[]', space=sflag, size = 0x4, offset = 0, fixed_abs, tag = 'sflag constant byte address 0x0 - dummy sync flag']
  #allocation70 [shape = 's32[]', space=sflag, size = 0x4, offset = 0, fixed_abs, tag = 'sflag constant byte address 0x0 - dummy sync flag']
  #allocation71 [shape = 's32[]', space=sflag, size = 0x4, offset = 0, fixed_abs, tag = 'sflag constant byte address 0x0 - dummy sync flag']
  #allocation72 [shape = 's32[]', space=sflag, size = 0x4, offset = 0, fixed_abs, tag = 'sflag constant byte address 0x0 - dummy sync flag']
  #allocation73 [shape = 's32[]', space=sflag, size = 0x4, offset = 0, fixed_abs, tag = 'sflag constant byte address 0x0 - dummy sync flag']
  %s0 = inlined_call_operand.hbm [shape: s32[16], index: 0, kind: input, shape index: {}]
  %s1 = inlined_call_operand.hbm [shape: bf16[24,8,256], index: 1, kind: input, shape index: {}]
  %s2 = inlined_call_operand.hbm [shape: f32[16,128], index: 2, kind: output, shape index: {}]
  %s3 = sld [smem:[#allocation0]]
  $region146: #{tpu_custom_call.1} parent=0
    _
  %s5 = ssub.s32 1, %s3
  %s6 = scalar_select 0, %s5, %s3
  %8 = dma.hbm_to_smem %s0, 16, [#allocation5], [#allocation4]
  %9 = dma.done [#allocation4], 16
  %10 = sfence
  $region1: #{tpu_custom_call.1} parent=0
    #allocation6 [shape = 'u8[8192]{0}', space=vmem, size = 0x2000, scoped, tag = 'output window, operand 0, single buffered']
    #allocation7 [shape = 's32[1]{0}', space=sflag, size = 0x4, scoped, tag = 'scoped memory for tpu_custom_call.1']
    %11 = vsyncpa [#allocation7], 0
    %s12 = sadd.s32 0, 0
    %s13 = smul.u32 2, %s12
    %s14 = sadd.s32 0, 0
    %s15 = ssub.s32 0, 0
    %s16 = ssub.s32 0, 0
    %p17 = scmp.ne.s32.totalorder 0, 0
    %p18 = scmp.lt.s32.totalorder 0, 0
    %p19 = pnand %p18, %p17
    %p20 = pneg %p19
    %s21 = sadd.s32 0, 2
    %s22 = scalar_select %p20, %s21, 0
    %p23 = scmp.eq.s32.totalorder 0, 0
    // Predicated region
    $region2: #{tpu_custom_call.1} parent=1 // pred_check
      %p24 = pneg %p23
    $region3: #{tpu_custom_call.1} parent=1 // pred_check_branch
      %26 = sbr.rel (%p24) target = $region5
    $region4: #{tpu_custom_call.1} parent=1 // pred_region
      %s27 = smul.u32 %s14, 16
      %s28 = sld [smem:[#allocation5 + %s27]]
      %s29 = smul.u32 %s28, 2
      %s30 = smul.addr %s29, 64
      %s31 = scalar_lea.hbm %s1, %s30
      %s32 = smul.u32 %s22, 32
      %s33 = smul.addr %s32, 4
      %s34 = scalar_lea.vmem [#allocation2], %s33
      %s35 = scalar_lea.sflag [#allocation3], %s22
      // Predicated region
      $region6: #{tpu_custom_call.1} parent=4 // pred_check
        _
      $region7: #{tpu_custom_call.1} parent=4 // pred_check_branch
        %37 = sbr.rel target = $region9
      $region8: #{tpu_custom_call.1} parent=4 // pred_region
        %38 = sst [smem:[#allocation10]] [#allocation9]
        %39 = sst [smem:[#allocation11]] [#allocation8]
      $region9: #{tpu_custom_call.1} parent=4 // pred_fallthru
        _
      %41 = shalt.err (0)
      %s43 = sshll.u32 %s34, 4
      %s44 = int_to_ptr.vmem [resolvable:$true] %s43
      %46 = dma.hbm_to_vmem [thread:$0]  %s31, 128, %s44, %s35
      %s47 = sadd.s32 %s27, 1
      %s48 = sld [smem:[#allocation5 + %s47]]
      %s49 = smul.u32 %s48, 2
      %s50 = smul.addr %s49, 64
      %s51 = scalar_lea.hbm %s1, %s50
      %s52 = sadd.s32 2, %s32
      %s53 = smul.addr %s52, 4
      %s54 = scalar_lea.vmem [#allocation2], %s53
      // Predicated region
      $region10: #{tpu_custom_call.1} parent=4 // pred_check
        _
      $region11: #{tpu_custom_call.1} parent=4 // pred_check_branch
        %56 = sbr.rel target = $region13
      $region12: #{tpu_custom_call.1} parent=4 // pred_region
        %57 = sst [smem:[#allocation10]] [#allocation13]
        %58 = sst [smem:[#allocation11]] [#allocation12]
      $region13: #{tpu_custom_call.1} parent=4 // pred_fallthru
        _
      %60 = shalt.err (0)
      %s62 = sshll.u32 %s54, 4
      %s63 = int_to_ptr.vmem [resolvable:$true] %s62
      %65 = dma.hbm_to_vmem [thread:$0]  %s51, 128, %s63, %s35
      %s66 = sadd.s32 %s27, 2
      %s67 = sld [smem:[#allocation5 + %s66]]
      %s68 = smul.u32 %s67, 2
      %s69 = smul.addr %s68, 64
      %s70 = scalar_lea.hbm %s1, %s69
      %s71 = sadd.s32 4, %s32
      %s72 = smul.addr %s71, 4
      %s73 = scalar_lea.vmem [#allocation2], %s72
      // Predicated region
      $region14: #{tpu_custom_call.1} parent=4 // pred_check
        _
      $region15: #{tpu_custom_call.1} parent=4 // pred_check_branch
        %75 = sbr.rel target = $region17
      $region16: #{tpu_custom_call.1} parent=4 // pred_region
        %76 = sst [smem:[#allocation10]] [#allocation15]
        %77 = sst [smem:[#allocation11]] [#allocation14]
      $region17: #{tpu_custom_call.1} parent=4 // pred_fallthru
        _
      %79 = shalt.err (0)
      %s81 = sshll.u32 %s73, 4
      %s82 = int_to_ptr.vmem [resolvable:$true] %s81
      %84 = dma.hbm_to_vmem [thread:$0]  %s70, 128, %s82, %s35
      %s85 = sadd.s32 %s27, 3
      %s86 = sld [smem:[#allocation5 + %s85]]
      %s87 = smul.u32 %s86, 2
      %s88 = smul.addr %s87, 64
      %s89 = scalar_lea.hbm %s1, %s88
      %s90 = sadd.s32 6, %s32
      %s91 = smul.addr %s90, 4
      %s92 = scalar_lea.vmem [#allocation2], %s91
      // Predicated region
      $region18: #{tpu_custom_call.1} parent=4 // pred_check
        _
      $region19: #{tpu_custom_call.1} parent=4 // pred_check_branch
        %94 = sbr.rel target = $region21
      $region20: #{tpu_custom_call.1} parent=4 // pred_region
        %95 = sst [smem:[#allocation10]] [#allocation17]
        %96 = sst [smem:[#allocation11]] [#allocation16]
      $region21: #{tpu_custom_call.1} parent=4 // pred_fallthru
        _
      %98 = shalt.err (0)
      %s100 = sshll.u32 %s92, 4
      %s101 = int_to_ptr.vmem [resolvable:$true] %s100
      %103 = dma.hbm_to_vmem [thread:$0]  %s89, 128, %s101, %s35
      %s104 = sadd.s32 %s27, 4
      %s105 = sld [smem:[#allocation5 + %s104]]
      %s106 = smul.u32 %s105, 2
      %s107 = smul.addr %s106, 64
      %s108 = scalar_lea.hbm %s1, %s107
      %s109 = sadd.s32 8, %s32
      %s110 = smul.addr %s109, 4
      %s111 = scalar_lea.vmem [#allocation2], %s110
      // Predicated region
      $region22: #{tpu_custom_call.1} parent=4 // pred_check
        _
      $region23: #{tpu_custom_call.1} parent=4 // pred_check_branch
        %113 = sbr.rel target = $region25
      $region24: #{tpu_custom_call.1} parent=4 // pred_region
        %114 = sst [smem:[#allocation10]] [#allocation19]
        %115 = sst [smem:[#allocation11]] [#allocation18]
      $region25: #{tpu_custom_call.1} parent=4 // pred_fallthru
        _
      %117 = shalt.err (0)
      %s119 = sshll.u32 %s111, 4
      %s120 = int_to_ptr.vmem [resolvable:$true] %s119
      %122 = dma.hbm_to_vmem [thread:$0]  %s108, 128, %s120, %s35
      %s123 = sadd.s32 %s27, 5
      %s124 = sld [smem:[#allocation5 + %s123]]
      %s125 = smul.u32 %s124, 2
      %s126 = smul.addr %s125, 64
      %s127 = scalar_lea.hbm %s1, %s126
      %s128 = sadd.s32 10, %s32
      %s129 = smul.addr %s128, 4
      %s130 = scalar_lea.vmem [#allocation2], %s129
      // Predicated region
      $region26: #{tpu_custom_call.1} parent=4 // pred_check
        _
      $region27: #{tpu_custom_call.1} parent=4 // pred_check_branch
        %132 = sbr.rel target = $region29
      $region28: #{tpu_custom_call.1} parent=4 // pred_region
        %133 = sst [smem:[#allocation10]] [#allocation21]
        %134 = sst [smem:[#allocation11]] [#allocation20]
      $region29: #{tpu_custom_call.1} parent=4 // pred_fallthru
        _
      %136 = shalt.err (0)
      %s138 = sshll.u32 %s130, 4
      %s139 = int_to_ptr.vmem [resolvable:$true] %s138
      %141 = dma.hbm_to_vmem [thread:$0]  %s127, 128, %s139, %s35
      %s142 = sadd.s32 %s27, 6
      %s143 = sld [smem:[#allocation5 + %s142]]
      %s144 = smul.u32 %s143, 2
      %s145 = smul.addr %s144, 64
      %s146 = scalar_lea.hbm %s1, %s145
      %s147 = sadd.s32 12, %s32
      %s148 = smul.addr %s147, 4
      %s149 = scalar_lea.vmem [#allocation2], %s148
      // Predicated region
      $region30: #{tpu_custom_call.1} parent=4 // pred_check
        _
      $region31: #{tpu_custom_call.1} parent=4 // pred_check_branch
        %151 = sbr.rel target = $region33
      $region32: #{tpu_custom_call.1} parent=4 // pred_region
        %152 = sst [smem:[#allocation10]] [#allocation23]
        %153 = sst [smem:[#allocation11]] [#allocation22]
      $region33: #{tpu_custom_call.1} parent=4 // pred_fallthru
        _
      %155 = shalt.err (0)
      %s157 = sshll.u32 %s149, 4
      %s158 = int_to_ptr.vmem [resolvable:$true] %s157
      %160 = dma.hbm_to_vmem [thread:$0]  %s146, 128, %s158, %s35
      %s161 = sadd.s32 %s27, 7
      %s162 = sld [smem:[#allocation5 + %s161]]
      %s163 = smul.u32 %s162, 2
      %s164 = smul.addr %s163, 64
      %s165 = scalar_lea.hbm %s1, %s164
      %s166 = sadd.s32 14, %s32
      %s167 = smul.addr %s166, 4
      %s168 = scalar_lea.vmem [#allocation2], %s167
      // Predicated region
      $region34: #{tpu_custom_call.1} parent=4 // pred_check
        _
      $region35: #{tpu_custom_call.1} parent=4 // pred_check_branch
        %170 = sbr.rel target = $region37
      $region36: #{tpu_custom_call.1} parent=4 // pred_region
        %171 = sst [smem:[#allocation10]] [#allocation25]
        %172 = sst [smem:[#allocation11]] [#allocation24]
      $region37: #{tpu_custom_call.1} parent=4 // pred_fallthru
        _
      %174 = shalt.err (0)
      %s176 = sshll.u32 %s168, 4
      %s177 = int_to_ptr.vmem [resolvable:$true] %s176
      %179 = dma.hbm_to_vmem [thread:$0]  %s165, 128, %s177, %s35
      %s180 = sadd.s32 %s27, 8
      %s181 = sld [smem:[#allocation5 + %s180]]
      %s182 = smul.u32 %s181, 2
      %s183 = smul.addr %s182, 64
      %s184 = scalar_lea.hbm %s1, %s183
      %s185 = sadd.s32 16, %s32
      %s186 = smul.addr %s185, 4
      %s187 = scalar_lea.vmem [#allocation2], %s186
      // Predicated region
      $region38: #{tpu_custom_call.1} parent=4 // pred_check
        _
      $region39: #{tpu_custom_call.1} parent=4 // pred_check_branch
        %189 = sbr.rel target = $region41
      $region40: #{tpu_custom_call.1} parent=4 // pred_region
        %190 = sst [smem:[#allocation10]] [#allocation27]
        %191 = sst [smem:[#allocation11]] [#allocation26]
      $region41: #{tpu_custom_call.1} parent=4 // pred_fallthru
        _
      %193 = shalt.err (0)
      %s195 = sshll.u32 %s187, 4
      %s196 = int_to_ptr.vmem [resolvable:$true] %s195
      %198 = dma.hbm_to_vmem [thread:$0]  %s184, 128, %s196, %s35
      %s199 = sadd.s32 %s27, 9
      %s200 = sld [smem:[#allocation5 + %s199]]
      %s201 = smul.u32 %s200, 2
      %s202 = smul.addr %s201, 64
      %s203 = scalar_lea.hbm %s1, %s202
      %s204 = sadd.s32 18, %s32
      %s205 = smul.addr %s204, 4
      %s206 = scalar_lea.vmem [#allocation2], %s205
      // Predicated region
      $region42: #{tpu_custom_call.1} parent=4 // pred_check
        _
      $region43: #{tpu_custom_call.1} parent=4 // pred_check_branch
        %208 = sbr.rel target = $region45
      $region44: #{tpu_custom_call.1} parent=4 // pred_region
        %209 = sst [smem:[#allocation10]] [#allocation29]
        %210 = sst [smem:[#allocation11]] [#allocation28]
      $region45: #{tpu_custom_call.1} parent=4 // pred_fallthru
        _
      %212 = shalt.err (0)
      %s214 = sshll.u32 %s206, 4
      %s215 = int_to_ptr.vmem [resolvable:$true] %s214
      %217 = dma.hbm_to_vmem [thread:$0]  %s203, 128, %s215, %s35
      %s218 = sadd.s32 %s27, 10
      %s219 = sld [smem:[#allocation5 + %s218]]
      %s220 = smul.u32 %s219, 2
      %s221 = smul.addr %s220, 64
      %s222 = scalar_lea.hbm %s1, %s221
      %s223 = sadd.s32 20, %s32
      %s224 = smul.addr %s223, 4
      %s225 = scalar_lea.vmem [#allocation2], %s224
      // Predicated region
      $region46: #{tpu_custom_call.1} parent=4 // pred_check
        _
      $region47: #{tpu_custom_call.1} parent=4 // pred_check_branch
        %227 = sbr.rel target = $region49
      $region48: #{tpu_custom_call.1} parent=4 // pred_region
        %228 = sst [smem:[#allocation10]] [#allocation31]
        %229 = sst [smem:[#allocation11]] [#allocation30]
      $region49: #{tpu_custom_call.1} parent=4 // pred_fallthru
        _
      %231 = shalt.err (0)
      %s233 = sshll.u32 %s225, 4
      %s234 = int_to_ptr.vmem [resolvable:$true] %s233
      %236 = dma.hbm_to_vmem [thread:$0]  %s222, 128, %s234, %s35
      %s237 = sadd.s32 %s27, 11
      %s238 = sld [smem:[#allocation5 + %s237]]
      %s239 = smul.u32 %s238, 2
      %s240 = smul.addr %s239, 64
      %s241 = scalar_lea.hbm %s1, %s240
      %s242 = sadd.s32 22, %s32
      %s243 = smul.addr %s242, 4
      %s244 = scalar_lea.vmem [#allocation2], %s243
      // Predicated region
      $region50: #{tpu_custom_call.1} parent=4 // pred_check
        _
      $region51: #{tpu_custom_call.1} parent=4 // pred_check_branch
        %246 = sbr.rel target = $region53
      $region52: #{tpu_custom_call.1} parent=4 // pred_region
        %247 = sst [smem:[#allocation10]] [#allocation33]
        %248 = sst [smem:[#allocation11]] [#allocation32]
      $region53: #{tpu_custom_call.1} parent=4 // pred_fallthru
        _
      %250 = shalt.err (0)
      %s252 = sshll.u32 %s244, 4
      %s253 = int_to_ptr.vmem [resolvable:$true] %s252
      %255 = dma.hbm_to_vmem [thread:$0]  %s241, 128, %s253, %s35
      %s256 = sadd.s32 %s27, 12
      %s257 = sld [smem:[#allocation5 + %s256]]
      %s258 = smul.u32 %s257, 2
      %s259 = smul.addr %s258, 64
      %s260 = scalar_lea.hbm %s1, %s259
      %s261 = sadd.s32 24, %s32
      %s262 = smul.addr %s261, 4
      %s263 = scalar_lea.vmem [#allocation2], %s262
      // Predicated region
      $region54: #{tpu_custom_call.1} parent=4 // pred_check
        _
      $region55: #{tpu_custom_call.1} parent=4 // pred_check_branch
        %265 = sbr.rel target = $region57
      $region56: #{tpu_custom_call.1} parent=4 // pred_region
        %266 = sst [smem:[#allocation10]] [#allocation35]
        %267 = sst [smem:[#allocation11]] [#allocation34]
      $region57: #{tpu_custom_call.1} parent=4 // pred_fallthru
        _
      %269 = shalt.err (0)
      %s271 = sshll.u32 %s263, 4
      %s272 = int_to_ptr.vmem [resolvable:$true] %s271
      %274 = dma.hbm_to_vmem [thread:$0]  %s260, 128, %s272, %s35
      %s275 = sadd.s32 %s27, 13
      %s276 = sld [smem:[#allocation5 + %s275]]
      %s277 = smul.u32 %s276, 2
      %s278 = smul.addr %s277, 64
      %s279 = scalar_lea.hbm %s1, %s278
      %s280 = sadd.s32 26, %s32
      %s281 = smul.addr %s280, 4
      %s282 = scalar_lea.vmem [#allocation2], %s281
      // Predicated region
      $region58: #{tpu_custom_call.1} parent=4 // pred_check
        _
      $region59: #{tpu_custom_call.1} parent=4 // pred_check_branch
        %284 = sbr.rel target = $region61
      $region60: #{tpu_custom_call.1} parent=4 // pred_region
        %285 = sst [smem:[#allocation10]] [#allocation37]
        %286 = sst [smem:[#allocation11]] [#allocation36]
      $region61: #{tpu_custom_call.1} parent=4 // pred_fallthru
        _
      %288 = shalt.err (0)
      %s290 = sshll.u32 %s282, 4
      %s291 = int_to_ptr.vmem [resolvable:$true] %s290
      %293 = dma.hbm_to_vmem [thread:$0]  %s279, 128, %s291, %s35
      %s294 = sadd.s32 %s27, 14
      %s295 = sld [smem:[#allocation5 + %s294]]
      %s296 = smul.u32 %s295, 2
      %s297 = smul.addr %s296, 64
      %s298 = scalar_lea.hbm %s1, %s297
      %s299 = sadd.s32 28, %s32
      %s300 = smul.addr %s299, 4
      %s301 = scalar_lea.vmem [#allocation2], %s300
      // Predicated region
      $region62: #{tpu_custom_call.1} parent=4 // pred_check
        _
      $region63: #{tpu_custom_call.1} parent=4 // pred_check_branch
        %303 = sbr.rel target = $region65
      $region64: #{tpu_custom_call.1} parent=4 // pred_region
        %304 = sst [smem:[#allocation10]] [#allocation39]
        %305 = sst [smem:[#allocation11]] [#allocation38]
      $region65: #{tpu_custom_call.1} parent=4 // pred_fallthru
        _
      %307 = shalt.err (0)
      %s309 = sshll.u32 %s301, 4
      %s310 = int_to_ptr.vmem [resolvable:$true] %s309
      %312 = dma.hbm_to_vmem [thread:$0]  %s298, 128, %s310, %s35
      %s313 = sadd.s32 %s27, 15
      %s314 = sld [smem:[#allocation5 + %s313]]
      %s315 = smul.u32 %s314, 2
      %s316 = smul.addr %s315, 64
      %s317 = scalar_lea.hbm %s1, %s316
      %s318 = sadd.s32 30, %s32
      %s319 = smul.addr %s318, 4
      %s320 = scalar_lea.vmem [#allocation2], %s319
      // Predicated region
      $region66: #{tpu_custom_call.1} parent=4 // pred_check
        _
      $region67: #{tpu_custom_call.1} parent=4 // pred_check_branch
        %322 = sbr.rel target = $region69
      $region68: #{tpu_custom_call.1} parent=4 // pred_region
        %323 = sst [smem:[#allocation10]] [#allocation41]
        %324 = sst [smem:[#allocation11]] [#allocation40]
      $region69: #{tpu_custom_call.1} parent=4 // pred_fallthru
        _
      %326 = shalt.err (0)
      %s328 = sshll.u32 %s320, 4
      %s329 = int_to_ptr.vmem [resolvable:$true] %s328
      %331 = dma.hbm_to_vmem [thread:$0]  %s317, 128, %s329, %s35
    $region5: #{tpu_custom_call.1} parent=1 // pred_fallthru
      _
    %s332 = sadd.s32 0, 1
    %p333 = scmp.lt.s32.totalorder %s332, 1
    // Predicated region
    $region70: #{tpu_custom_call.1} parent=1 // pred_check
      %p334 = pneg %p333
    $region71: #{tpu_custom_call.1} parent=1 // pred_check_branch
      %336 = sbr.rel (%p334) target = $region73
    $region72: #{tpu_custom_call.1} parent=1 // pred_region
      %s337 = sadd.s32 %s14, 1
      %s338 = ssub.s32 1, %s22
      %s339 = smul.u32 %s337, 16
      %s340 = sld [smem:[#allocation5 + %s339]]
      %s341 = smul.u32 %s340, 2
      %s342 = smul.addr %s341, 64
      %s343 = scalar_lea.hbm %s1, %s342
      %s344 = smul.u32 %s338, 32
      %s345 = smul.addr %s344, 4
      %s346 = scalar_lea.vmem [#allocation2], %s345
      %s347 = scalar_lea.sflag [#allocation3], %s338
      // Predicated region
      $region74: #{tpu_custom_call.1} parent=72 // pred_check
        _
      $region75: #{tpu_custom_call.1} parent=72 // pred_check_branch
        %349 = sbr.rel target = $region77
      $region76: #{tpu_custom_call.1} parent=72 // pred_region
        %350 = sst [smem:[#allocation10]] [#allocation43]
        %351 = sst [smem:[#allocation11]] [#allocation42]
      $region77: #{tpu_custom_call.1} parent=72 // pred_fallthru
        _
      %353 = shalt.err (0)
      %s355 = sshll.u32 %s346, 4
      %s356 = int_to_ptr.vmem [resolvable:$true] %s355
      %358 = dma.hbm_to_vmem [thread:$0]  %s343, 128, %s356, %s347
      %s359 = sadd.s32 %s339, 1
      %s360 = sld [smem:[#allocation5 + %s359]]
      %s361 = smul.u32 %s360, 2
      %s362 = smul.addr %s361, 64
      %s363 = scalar_lea.hbm %s1, %s362
      %s364 = sadd.s32 2, %s344
      %s365 = smul.addr %s364, 4
      %s366 = scalar_lea.vmem [#allocation2], %s365
      // Predicated region
      $region78: #{tpu_custom_call.1} parent=72 // pred_check
        _
      $region79: #{tpu_custom_call.1} parent=72 // pred_check_branch
        %368 = sbr.rel target = $region81
      $region80: #{tpu_custom_call.1} parent=72 // pred_region
        %369 = sst [smem:[#allocation10]] [#allocation45]
        %370 = sst [smem:[#allocation11]] [#allocation44]
      $region81: #{tpu_custom_call.1} parent=72 // pred_fallthru
        _
      %372 = shalt.err (0)
      %s374 = sshll.u32 %s366, 4
      %s375 = int_to_ptr.vmem [resolvable:$true] %s374
      %377 = dma.hbm_to_vmem [thread:$0]  %s363, 128, %s375, %s347
      %s378 = sadd.s32 %s339, 2
      %s379 = sld [smem:[#allocation5 + %s378]]
      %s380 = smul.u32 %s379, 2
      %s381 = smul.addr %s380, 64
      %s382 = scalar_lea.hbm %s1, %s381
      %s383 = sadd.s32 4, %s344
      %s384 = smul.addr %s383, 4
      %s385 = scalar_lea.vmem [#allocation2], %s384
      // Predicated region
      $region82: #{tpu_custom_call.1} parent=72 // pred_check
        _
      $region83: #{tpu_custom_call.1} parent=72 // pred_check_branch
        %387 = sbr.rel target = $region85
      $region84: #{tpu_custom_call.1} parent=72 // pred_region
        %388 = sst [smem:[#allocation10]] [#allocation47]
        %389 = sst [smem:[#allocation11]] [#allocation46]
      $region85: #{tpu_custom_call.1} parent=72 // pred_fallthru
        _
      %391 = shalt.err (0)
      %s393 = sshll.u32 %s385, 4
      %s394 = int_to_ptr.vmem [resolvable:$true] %s393
      %396 = dma.hbm_to_vmem [thread:$0]  %s382, 128, %s394, %s347
      %s397 = sadd.s32 %s339, 3
      %s398 = sld [smem:[#allocation5 + %s397]]
      %s399 = smul.u32 %s398, 2
      %s400 = smul.addr %s399, 64
      %s401 = scalar_lea.hbm %s1, %s400
      %s402 = sadd.s32 6, %s344
      %s403 = smul.addr %s402, 4
      %s404 = scalar_lea.vmem [#allocation2], %s403
      // Predicated region
      $region86: #{tpu_custom_call.1} parent=72 // pred_check
        _
      $region87: #{tpu_custom_call.1} parent=72 // pred_check_branch
        %406 = sbr.rel target = $region89
      $region88: #{tpu_custom_call.1} parent=72 // pred_region
        %407 = sst [smem:[#allocation10]] [#allocation49]
        %408 = sst [smem:[#allocation11]] [#allocation48]
      $region89: #{tpu_custom_call.1} parent=72 // pred_fallthru
        _
      %410 = shalt.err (0)
      %s412 = sshll.u32 %s404, 4
      %s413 = int_to_ptr.vmem [resolvable:$true] %s412
      %415 = dma.hbm_to_vmem [thread:$0]  %s401, 128, %s413, %s347
      %s416 = sadd.s32 %s339, 4
      %s417 = sld [smem:[#allocation5 + %s416]]
      %s418 = smul.u32 %s417, 2
      %s419 = smul.addr %s418, 64
      %s420 = scalar_lea.hbm %s1, %s419
      %s421 = sadd.s32 8, %s344
      %s422 = smul.addr %s421, 4
      %s423 = scalar_lea.vmem [#allocation2], %s422
      // Predicated region
      $region90: #{tpu_custom_call.1} parent=72 // pred_check
        _
      $region91: #{tpu_custom_call.1} parent=72 // pred_check_branch
        %425 = sbr.rel target = $region93
      $region92: #{tpu_custom_call.1} parent=72 // pred_region
        %426 = sst [smem:[#allocation10]] [#allocation51]
        %427 = sst [smem:[#allocation11]] [#allocation50]
      $region93: #{tpu_custom_call.1} parent=72 // pred_fallthru
        _
      %429 = shalt.err (0)
      %s431 = sshll.u32 %s423, 4
      %s432 = int_to_ptr.vmem [resolvable:$true] %s431
      %434 = dma.hbm_to_vmem [thread:$0]  %s420, 128, %s432, %s347
      %s435 = sadd.s32 %s339, 5
      %s436 = sld [smem:[#allocation5 + %s435]]
      %s437 = smul.u32 %s436, 2
      %s438 = smul.addr %s437, 64
      %s439 = scalar_lea.hbm %s1, %s438
      %s440 = sadd.s32 10, %s344
      %s441 = smul.addr %s440, 4
      %s442 = scalar_lea.vmem [#allocation2], %s441
      // Predicated region
      $region94: #{tpu_custom_call.1} parent=72 // pred_check
        _
      $region95: #{tpu_custom_call.1} parent=72 // pred_check_branch
        %444 = sbr.rel target = $region97
      $region96: #{tpu_custom_call.1} parent=72 // pred_region
        %445 = sst [smem:[#allocation10]] [#allocation53]
        %446 = sst [smem:[#allocation11]] [#allocation52]
      $region97: #{tpu_custom_call.1} parent=72 // pred_fallthru
        _
      %448 = shalt.err (0)
      %s450 = sshll.u32 %s442, 4
      %s451 = int_to_ptr.vmem [resolvable:$true] %s450
      %453 = dma.hbm_to_vmem [thread:$0]  %s439, 128, %s451, %s347
      %s454 = sadd.s32 %s339, 6
      %s455 = sld [smem:[#allocation5 + %s454]]
      %s456 = smul.u32 %s455, 2
      %s457 = smul.addr %s456, 64
      %s458 = scalar_lea.hbm %s1, %s457
      %s459 = sadd.s32 12, %s344
      %s460 = smul.addr %s459, 4
      %s461 = scalar_lea.vmem [#allocation2], %s460
      // Predicated region
      $region98: #{tpu_custom_call.1} parent=72 // pred_check
        _
      $region99: #{tpu_custom_call.1} parent=72 // pred_check_branch
        %463 = sbr.rel target = $region101
      $region100: #{tpu_custom_call.1} parent=72 // pred_region
        %464 = sst [smem:[#allocation10]] [#allocation55]
        %465 = sst [smem:[#allocation11]] [#allocation54]
      $region101: #{tpu_custom_call.1} parent=72 // pred_fallthru
        _
      %467 = shalt.err (0)
      %s469 = sshll.u32 %s461, 4
      %s470 = int_to_ptr.vmem [resolvable:$true] %s469
      %472 = dma.hbm_to_vmem [thread:$0]  %s458, 128, %s470, %s347
      %s473 = sadd.s32 %s339, 7
      %s474 = sld [smem:[#allocation5 + %s473]]
      %s475 = smul.u32 %s474, 2
      %s476 = smul.addr %s475, 64
      %s477 = scalar_lea.hbm %s1, %s476
      %s478 = sadd.s32 14, %s344
      %s479 = smul.addr %s478, 4
      %s480 = scalar_lea.vmem [#allocation2], %s479
      // Predicated region
      $region102: #{tpu_custom_call.1} parent=72 // pred_check
        _
      $region103: #{tpu_custom_call.1} parent=72 // pred_check_branch
        %482 = sbr.rel target = $region105
      $region104: #{tpu_custom_call.1} parent=72 // pred_region
        %483 = sst [smem:[#allocation10]] [#allocation57]
        %484 = sst [smem:[#allocation11]] [#allocation56]
      $region105: #{tpu_custom_call.1} parent=72 // pred_fallthru
        _
      %486 = shalt.err (0)
      %s488 = sshll.u32 %s480, 4
      %s489 = int_to_ptr.vmem [resolvable:$true] %s488
      %491 = dma.hbm_to_vmem [thread:$0]  %s477, 128, %s489, %s347
      %s492 = sadd.s32 %s339, 8
      %s493 = sld [smem:[#allocation5 + %s492]]
      %s494 = smul.u32 %s493, 2
      %s495 = smul.addr %s494, 64
      %s496 = scalar_lea.hbm %s1, %s495
      %s497 = sadd.s32 16, %s344
      %s498 = smul.addr %s497, 4
      %s499 = scalar_lea.vmem [#allocation2], %s498
      // Predicated region
      $region106: #{tpu_custom_call.1} parent=72 // pred_check
        _
      $region107: #{tpu_custom_call.1} parent=72 // pred_check_branch
        %501 = sbr.rel target = $region109
      $region108: #{tpu_custom_call.1} parent=72 // pred_region
        %502 = sst [smem:[#allocation10]] [#allocation59]
        %503 = sst [smem:[#allocation11]] [#allocation58]
      $region109: #{tpu_custom_call.1} parent=72 // pred_fallthru
        _
      %505 = shalt.err (0)
      %s507 = sshll.u32 %s499, 4
      %s508 = int_to_ptr.vmem [resolvable:$true] %s507
      %510 = dma.hbm_to_vmem [thread:$0]  %s496, 128, %s508, %s347
      %s511 = sadd.s32 %s339, 9
      %s512 = sld [smem:[#allocation5 + %s511]]
      %s513 = smul.u32 %s512, 2
      %s514 = smul.addr %s513, 64
      %s515 = scalar_lea.hbm %s1, %s514
      %s516 = sadd.s32 18, %s344
      %s517 = smul.addr %s516, 4
      %s518 = scalar_lea.vmem [#allocation2], %s517
      // Predicated region
      $region110: #{tpu_custom_call.1} parent=72 // pred_check
        _
      $region111: #{tpu_custom_call.1} parent=72 // pred_check_branch
        %520 = sbr.rel target = $region113
      $region112: #{tpu_custom_call.1} parent=72 // pred_region
        %521 = sst [smem:[#allocation10]] [#allocation61]
        %522 = sst [smem:[#allocation11]] [#allocation60]
      $region113: #{tpu_custom_call.1} parent=72 // pred_fallthru
        _
      %524 = shalt.err (0)
      %s526 = sshll.u32 %s518, 4
      %s527 = int_to_ptr.vmem [resolvable:$true] %s526
      %529 = dma.hbm_to_vmem [thread:$0]  %s515, 128, %s527, %s347
      %s530 = sadd.s32 %s339, 10
      %s531 = sld [smem:[#allocation5 + %s530]]
      %s532 = smul.u32 %s531, 2
      %s533 = smul.addr %s532, 64
      %s534 = scalar_lea.hbm %s1, %s533
      %s535 = sadd.s32 20, %s344
      %s536 = smul.addr %s535, 4
      %s537 = scalar_lea.vmem [#allocation2], %s536
      // Predicated region
      $region114: #{tpu_custom_call.1} parent=72 // pred_check
        _
      $region115: #{tpu_custom_call.1} parent=72 // pred_check_branch
        %539 = sbr.rel target = $region117
      $region116: #{tpu_custom_call.1} parent=72 // pred_region
        %540 = sst [smem:[#allocation10]] [#allocation63]
        %541 = sst [smem:[#allocation11]] [#allocation62]
      $region117: #{tpu_custom_call.1} parent=72 // pred_fallthru
        _
      %543 = shalt.err (0)
      %s545 = sshll.u32 %s537, 4
      %s546 = int_to_ptr.vmem [resolvable:$true] %s545
      %548 = dma.hbm_to_vmem [thread:$0]  %s534, 128, %s546, %s347
      %s549 = sadd.s32 %s339, 11
      %s550 = sld [smem:[#allocation5 + %s549]]
      %s551 = smul.u32 %s550, 2
      %s552 = smul.addr %s551, 64
      %s553 = scalar_lea.hbm %s1, %s552
      %s554 = sadd.s32 22, %s344
      %s555 = smul.addr %s554, 4
      %s556 = scalar_lea.vmem [#allocation2], %s555
      // Predicated region
      $region118: #{tpu_custom_call.1} parent=72 // pred_check
        _
      $region119: #{tpu_custom_call.1} parent=72 // pred_check_branch
        %558 = sbr.rel target = $region121
      $region120: #{tpu_custom_call.1} parent=72 // pred_region
        %559 = sst [smem:[#allocation10]] [#allocation65]
        %560 = sst [smem:[#allocation11]] [#allocation64]
      $region121: #{tpu_custom_call.1} parent=72 // pred_fallthru
        _
      %562 = shalt.err (0)
      %s564 = sshll.u32 %s556, 4
      %s565 = int_to_ptr.vmem [resolvable:$true] %s564
      %567 = dma.hbm_to_vmem [thread:$0]  %s553, 128, %s565, %s347
      %s568 = sadd.s32 %s339, 12
      %s569 = sld [smem:[#allocation5 + %s568]]
      %s570 = smul.u32 %s569, 2
      %s571 = smul.addr %s570, 64
      %s572 = scalar_lea.hbm %s1, %s571
      %s573 = sadd.s32 24, %s344
      %s574 = smul.addr %s573, 4
      %s575 = scalar_lea.vmem [#allocation2], %s574
      // Predicated region
      $region122: #{tpu_custom_call.1} parent=72 // pred_check
        _
      $region123: #{tpu_custom_call.1} parent=72 // pred_check_branch
        %577 = sbr.rel target = $region125
      $region124: #{tpu_custom_call.1} parent=72 // pred_region
        %578 = sst [smem:[#allocation10]] [#allocation67]
        %579 = sst [smem:[#allocation11]] [#allocation66]
      $region125: #{tpu_custom_call.1} parent=72 // pred_fallthru
        _
      %581 = shalt.err (0)
      %s583 = sshll.u32 %s575, 4
      %s584 = int_to_ptr.vmem [resolvable:$true] %s583
      %586 = dma.hbm_to_vmem [thread:$0]  %s572, 128, %s584, %s347
      %s587 = sadd.s32 %s339, 13
      %s588 = sld [smem:[#allocation5 + %s587]]
      %s589 = smul.u32 %s588, 2
      %s590 = smul.addr %s589, 64
      %s591 = scalar_lea.hbm %s1, %s590
      %s592 = sadd.s32 26, %s344
      %s593 = smul.addr %s592, 4
      %s594 = scalar_lea.vmem [#allocation2], %s593
      // Predicated region
      $region126: #{tpu_custom_call.1} parent=72 // pred_check
        _
      $region127: #{tpu_custom_call.1} parent=72 // pred_check_branch
        %596 = sbr.rel target = $region129
      $region128: #{tpu_custom_call.1} parent=72 // pred_region
        %597 = sst [smem:[#allocation10]] [#allocation69]
        %598 = sst [smem:[#allocation11]] [#allocation68]
      $region129: #{tpu_custom_call.1} parent=72 // pred_fallthru
        _
      %600 = shalt.err (0)
      %s602 = sshll.u32 %s594, 4
      %s603 = int_to_ptr.vmem [resolvable:$true] %s602
      %605 = dma.hbm_to_vmem [thread:$0]  %s591, 128, %s603, %s347
      %s606 = sadd.s32 %s339, 14
      %s607 = sld [smem:[#allocation5 + %s606]]
      %s608 = smul.u32 %s607, 2
      %s609 = smul.addr %s608, 64
      %s610 = scalar_lea.hbm %s1, %s609
      %s611 = sadd.s32 28, %s344
      %s612 = smul.addr %s611, 4
      %s613 = scalar_lea.vmem [#allocation2], %s612
      // Predicated region
      $region130: #{tpu_custom_call.1} parent=72 // pred_check
        _
      $region131: #{tpu_custom_call.1} parent=72 // pred_check_branch
        %615 = sbr.rel target = $region133
      $region132: #{tpu_custom_call.1} parent=72 // pred_region
        %616 = sst [smem:[#allocation10]] [#allocation71]
        %617 = sst [smem:[#allocation11]] [#allocation70]
      $region133: #{tpu_custom_call.1} parent=72 // pred_fallthru
        _
      %619 = shalt.err (0)
      %s621 = sshll.u32 %s613, 4
      %s622 = int_to_ptr.vmem [resolvable:$true] %s621
      %624 = dma.hbm_to_vmem [thread:$0]  %s610, 128, %s622, %s347
      %s625 = sadd.s32 %s339, 15
      %s626 = sld [smem:[#allocation5 + %s625]]
      %s627 = smul.u32 %s626, 2
      %s628 = smul.addr %s627, 64
      %s629 = scalar_lea.hbm %s1, %s628
      %s630 = sadd.s32 30, %s344
      %s631 = smul.addr %s630, 4
      %s632 = scalar_lea.vmem [#allocation2], %s631
      // Predicated region
      $region134: #{tpu_custom_call.1} parent=72 // pred_check
        _
      $region135: #{tpu_custom_call.1} parent=72 // pred_check_branch
        %634 = sbr.rel target = $region137
      $region136: #{tpu_custom_call.1} parent=72 // pred_region
        %635 = sst [smem:[#allocation10]] [#allocation73]
        %636 = sst [smem:[#allocation11]] [#allocation72]
      $region137: #{tpu_custom_call.1} parent=72 // pred_fallthru
        _
      %638 = shalt.err (0)
      %s640 = sshll.u32 %s632, 4
      %s641 = int_to_ptr.vmem [resolvable:$true] %s640
      %643 = dma.hbm_to_vmem [thread:$0]  %s629, 128, %s641, %s347
    $region73: #{tpu_custom_call.1} parent=1 // pred_fallthru
      _
    %s644 = scalar_lea.sflag [#allocation3], %s22
    %s645 = smul.u32 4, 1
    %s646 = smul.u32 %s645, 2
    %s647 = sshll.u32 %s646, 4
    %648 = dma.done %s644, %s647
    %s649 = sshll.u32 %s646, 4
    %650 = dma.done %s644, %s649
    %s651 = sshll.u32 %s646, 4
    %652 = dma.done %s644, %s651
    %s653 = sshll.u32 %s646, 4
    %654 = dma.done %s644, %s653
    %s655 = sshll.u32 %s646, 4
    %656 = dma.done %s644, %s655
    %s657 = sshll.u32 %s646, 4
    %658 = dma.done %s644, %s657
    %s659 = sshll.u32 %s646, 4
    %660 = dma.done %s644, %s659
    %s661 = sshll.u32 %s646, 4
    %662 = dma.done %s644, %s661
    %s663 = sshll.u32 %s646, 4
    %664 = dma.done %s644, %s663
    %s665 = sshll.u32 %s646, 4
    %666 = dma.done %s644, %s665
    %s667 = sshll.u32 %s646, 4
    %668 = dma.done %s644, %s667
    %s669 = sshll.u32 %s646, 4
    %670 = dma.done %s644, %s669
    %s671 = sshll.u32 %s646, 4
    %672 = dma.done %s644, %s671
    %s673 = sshll.u32 %s646, 4
    %674 = dma.done %s644, %s673
    %s675 = sshll.u32 %s646, 4
    %676 = dma.done %s644, %s675
    %s677 = sshll.u32 %s646, 4
    %678 = dma.done %s644, %s677
    %s679 = smul.u32 %s22, 32
    %s680 = smul.addr %s679, 4
    %s681 = scalar_lea.vmem [#allocation2], %s680
    %v682 = vld [vmem:[%s681] sm:$0xf]
    %v683 = vld [vmem:[%s681 + $0x8] sm:$0xf]
    %v684 = vld [vmem:[%s681 + $0x10] sm:$0xf]
    %v685 = vld [vmem:[%s681 + $0x18] sm:$0xf]
    %v686 = vld [vmem:[%s681 + $0x20] sm:$0xf]
    %v687 = vld [vmem:[%s681 + $0x28] sm:$0xf]
    %v688 = vld [vmem:[%s681 + $0x30] sm:$0xf]
    %v689 = vld [vmem:[%s681 + $0x38] sm:$0xf]
    %v690 = vld [vmem:[%s681 + $0x40] sm:$0xf]
    %v691 = vld [vmem:[%s681 + $0x48] sm:$0xf]
    %v692 = vld [vmem:[%s681 + $0x50] sm:$0xf]
    %v693 = vld [vmem:[%s681 + $0x58] sm:$0xf]
    %v694 = vld [vmem:[%s681 + $0x60] sm:$0xf]
    %v695 = vld [vmem:[%s681 + $0x68] sm:$0xf]
    %v696 = vld [vmem:[%s681 + $0x70] sm:$0xf]
    %v697 = vld [vmem:[%s681 + $0x78] sm:$0xf]
    %v698 = vunpack.c.l.bf16 %v682
    %v699 = vunpack.c.l.bf16 %v683
    %v700 = vunpack.c.l.bf16 %v684
    %v701 = vunpack.c.l.bf16 %v685
    %v702 = vunpack.c.l.bf16 %v686
    %v703 = vunpack.c.l.bf16 %v687
    %v704 = vunpack.c.l.bf16 %v688
    %v705 = vunpack.c.l.bf16 %v689
    %v706 = vunpack.c.l.bf16 %v690
    %v707 = vunpack.c.l.bf16 %v691
    %v708 = vunpack.c.l.bf16 %v692
    %v709 = vunpack.c.l.bf16 %v693
    %v710 = vunpack.c.l.bf16 %v694
    %v711 = vunpack.c.l.bf16 %v695
    %v712 = vunpack.c.l.bf16 %v696
    %v713 = vunpack.c.l.bf16 %v697
    %v714 = vrot.slane %v698, 4
    %v715 = vadd.f32 %v698, %v714
    %v716 = vrot.slane %v715, 2
    %v717 = vadd.f32 %v715, %v716
    %v718 = vrot.slane %v717, 1
    %v719 = vadd.f32 %v717, %v718
    %v720 = vrot.slane %v699, 4
    %v721 = vadd.f32 %v699, %v720
    %v722 = vrot.slane %v721, 2
    %v723 = vadd.f32 %v721, %v722
    %v724 = vrot.slane %v723, 1
    %v725 = vadd.f32 %v723, %v724
    %v726 = vrot.slane %v700, 4
    %v727 = vadd.f32 %v700, %v726
    %v728 = vrot.slane %v727, 2
    %v729 = vadd.f32 %v727, %v728
    %v730 = vrot.slane %v729, 1
    %v731 = vadd.f32 %v729, %v730
    %v732 = vrot.slane %v701, 4
    %v733 = vadd.f32 %v701, %v732
    %v734 = vrot.slane %v733, 2
    %v735 = vadd.f32 %v733, %v734
    %v736 = vrot.slane %v735, 1
    %v737 = vadd.f32 %v735, %v736
    %v738 = vrot.slane %v702, 4
    %v739 = vadd.f32 %v702, %v738
    %v740 = vrot.slane %v739, 2
    %v741 = vadd.f32 %v739, %v740
    %v742 = vrot.slane %v741, 1
    %v743 = vadd.f32 %v741, %v742
    %v744 = vrot.slane %v703, 4
    %v745 = vadd.f32 %v703, %v744
    %v746 = vrot.slane %v745, 2
    %v747 = vadd.f32 %v745, %v746
    %v748 = vrot.slane %v747, 1
    %v749 = vadd.f32 %v747, %v748
    %v750 = vrot.slane %v704, 4
    %v751 = vadd.f32 %v704, %v750
    %v752 = vrot.slane %v751, 2
    %v753 = vadd.f32 %v751, %v752
    %v754 = vrot.slane %v753, 1
    %v755 = vadd.f32 %v753, %v754
    %v756 = vrot.slane %v705, 4
    %v757 = vadd.f32 %v705, %v756
    %v758 = vrot.slane %v757, 2
    %v759 = vadd.f32 %v757, %v758
    %v760 = vrot.slane %v759, 1
    %v761 = vadd.f32 %v759, %v760
    %v762 = vrot.slane %v706, 4
    %v763 = vadd.f32 %v706, %v762
    %v764 = vrot.slane %v763, 2
    %v765 = vadd.f32 %v763, %v764
    %v766 = vrot.slane %v765, 1
    %v767 = vadd.f32 %v765, %v766
    %v768 = vrot.slane %v707, 4
    %v769 = vadd.f32 %v707, %v768
    %v770 = vrot.slane %v769, 2
    %v771 = vadd.f32 %v769, %v770
    %v772 = vrot.slane %v771, 1
    %v773 = vadd.f32 %v771, %v772
    %v774 = vrot.slane %v708, 4
    %v775 = vadd.f32 %v708, %v774
    %v776 = vrot.slane %v775, 2
    %v777 = vadd.f32 %v775, %v776
    %v778 = vrot.slane %v777, 1
    %v779 = vadd.f32 %v777, %v778
    %v780 = vrot.slane %v709, 4
    %v781 = vadd.f32 %v709, %v780
    %v782 = vrot.slane %v781, 2
    %v783 = vadd.f32 %v781, %v782
    %v784 = vrot.slane %v783, 1
    %v785 = vadd.f32 %v783, %v784
    %v786 = vrot.slane %v710, 4
    %v787 = vadd.f32 %v710, %v786
    %v788 = vrot.slane %v787, 2
    %v789 = vadd.f32 %v787, %v788
    %v790 = vrot.slane %v789, 1
    %v791 = vadd.f32 %v789, %v790
    %v792 = vrot.slane %v711, 4
    %v793 = vadd.f32 %v711, %v792
    %v794 = vrot.slane %v793, 2
    %v795 = vadd.f32 %v793, %v794
    %v796 = vrot.slane %v795, 1
    %v797 = vadd.f32 %v795, %v796
    %v798 = vrot.slane %v712, 4
    %v799 = vadd.f32 %v712, %v798
    %v800 = vrot.slane %v799, 2
    %v801 = vadd.f32 %v799, %v800
    %v802 = vrot.slane %v801, 1
    %v803 = vadd.f32 %v801, %v802
    %v804 = vrot.slane %v713, 4
    %v805 = vadd.f32 %v713, %v804
    %v806 = vrot.slane %v805, 2
    %v807 = vadd.f32 %v805, %v806
    %v808 = vrot.slane %v807, 1
    %v809 = vadd.f32 %v807, %v808
    %v810 = vmul.f32 %v719, 0.125
    %v811 = vmul.f32 %v725, 0.125
    %v812 = vmul.f32 %v731, 0.125
    %v813 = vmul.f32 %v737, 0.125
    %v814 = vmul.f32 %v743, 0.125
    %v815 = vmul.f32 %v749, 0.125
    %v816 = vmul.f32 %v755, 0.125
    %v817 = vmul.f32 %v761, 0.125
    %v818 = vmul.f32 %v767, 0.125
    %v819 = vmul.f32 %v773, 0.125
    %v820 = vmul.f32 %v779, 0.125
    %v821 = vmul.f32 %v785, 0.125
    %v822 = vmul.f32 %v791, 0.125
    %v823 = vmul.f32 %v797, 0.125
    %v824 = vmul.f32 %v803, 0.125
    %v825 = vmul.f32 %v809, 0.125
    %vm842 = vcmask 1041409
    %v843 = vsel %vm842, %v811, %v810
    %vm844 = vcmask 1042434
    %v845 = vsel %vm844, %v812, %v843
    %vm846 = vcmask 1043459
    %v847 = vsel %vm846, %v813, %v845
    %vm848 = vcmask 1044484
    %v849 = vsel %vm848, %v814, %v847
    %vm850 = vcmask 1045509
    %v851 = vsel %vm850, %v815, %v849
    %vm852 = vcmask 1046534
    %v853 = vsel %vm852, %v816, %v851
    %vm854 = vcmask 1047559
    %v855 = vsel %vm854, %v817, %v853
    %v856 = vsel %vm842, %v819, %v818
    %v857 = vsel %vm844, %v820, %v856
    %v858 = vsel %vm846, %v821, %v857
    %v859 = vsel %vm848, %v822, %v858
    %v860 = vsel %vm850, %v823, %v859
    %v861 = vsel %vm852, %v824, %v860
    %v862 = vsel %vm854, %v825, %v861
    %865 = vst [vmem:[#allocation6] sm:$0xff] %v855
    %866 = vst [vmem:[#allocation6 + $0x8] sm:$0xff] %v862
    // Predicated region
    $region138: #{tpu_custom_call.1} parent=1 // pred_check
      _
    $region139: #{tpu_custom_call.1} parent=1 // pred_check_branch
      %868 = sbr.rel (0) target = $region141
    $region140: #{tpu_custom_call.1} parent=1 // pred_region
      %s869 = sadd.s32 0, 0
      %s870 = smul.u32 2, %s869
      %s872 = ssub.s32 256, 256
      %873 = vsyncadd [#allocation7], %s872
      %s874 = smul.addr %s870, 128
      %s875 = scalar_lea.hbm %s2, %s874
      %s876 = sshll.u32 [#allocation6], 4
      %s877 = int_to_ptr.vmem [resolvable:$true] %s876
      %882 = dma.vmem_to_hbm [thread:$0]  %s877, 256, %s875, [#allocation7], 128, 128, 8
    $region141: #{tpu_custom_call.1} parent=1 // pred_fallthru
      _
    // Predicated region
    $region142: #{tpu_custom_call.1} parent=1 // pred_check
      _
    $region143: #{tpu_custom_call.1} parent=1 // pred_check_branch
      %884 = sbr.rel (0) target = $region145
    $region144: #{tpu_custom_call.1} parent=1 // pred_region
      %885 = dma.done [#allocation7], 256
    $region145: #{tpu_custom_call.1} parent=1 // pred_fallthru
      _
    %886 = vsyncpa [#allocation7], 1
  %887 = vsyncmov [#allocation3]
  %s888 = vpop.sfrf %887
  %p889 = scmp.eq.s32.totalorder %s888, 0
  %p890 = pneg %p889
  %892 = shalt.err (%p890)
  %s893 = scalar_lea.sflag [#allocation3], 1
  %894 = vsyncmov %s893
  %s895 = vpop.sfrf %894
  %p896 = scmp.eq.s32.totalorder %s895, 0
  %p897 = pneg %p896
  %899 = shalt.err (%p897)

</llo_original>
